<compile_context>
chip_gen: v7x
topology: tpu7x:2x2x1
jax: 0.10.0
libtpu: 0.0.40
codegen_flags: <defaults>
</compile_context>

<pallas_src>
import jax
import jax.numpy as jnp
from jax import lax
from jax.experimental import pallas as pl
from jax.experimental.pallas import tpu as pltpu

LN_EPS = 1e-12  # config.layer_norm_eps (BERT default)


def _round_up(x, m):
    return ((x + m - 1) // m) * m


def bert_embeddings(input_ids, token_type_ids, position_ids,
                    word_table, ttype_table, pos_table, gamma, beta,
                    *, block_tokens=256):
    B, S = input_ids.shape
    V, H = word_table.shape
    Vt = ttype_table.shape[0]

    # Tokens per tile: multiple of 8 (sublane), capped at block_tokens.
    T = min(_round_up(S, 8), _round_up(block_tokens, 8))
    S_pad = _round_up(S, T)
    n_blk = S_pad // T

    # Combined-wait byte accounting requires a (T, H) view of the word table
    # and identical per-row copy sizes (wrows dtype == table dtype).
    assert V >= T, "vocab must be >= token tile size for the combined DMA wait"
    row_dtype = word_table.dtype
    out_dtype = word_table.dtype

    ids = input_ids.astype(jnp.int32)
    tts = token_type_ids.astype(jnp.int32)
    if S_pad != S:
        ids = jnp.pad(ids, ((0, 0), (0, S_pad - S)))     # pad with id 0 (valid row)
        tts = jnp.pad(tts, ((0, 0), (0, S_pad - S)))

    # Word ids -> SMEM scalar prefetch (flat, int32), layout (B, S_pad) row-major.
    wid_flat = ids.reshape(B * S_pad)

    # Token-type ids as a lane-dense (B, S_pad, 1) float column (no one-hot).
    tt_col = tts.astype(jnp.float32)[..., None]

    # Position embeddings: one contiguous (S, H) slice, streamed as (T, H) tiles.
    pos_slice = pos_table[position_ids]                  # (S, H)
    if S_pad != S:
        pos_slice = jnp.pad(pos_slice, ((0, S_pad - S), (0, 0)))

    gamma2 = gamma.reshape(1, H).astype(jnp.float32)
    beta2 = beta.reshape(1, H).astype(jnp.float32)

    inv_h = 1.0 / float(H)
    itemsize = jnp.dtype(row_dtype).itemsize

    def kernel(wid_ref,                                   # SMEM (B*S_pad,) int32
               tt_ref, pos_ref, ttab_ref, gamma_ref, beta_ref,  # VMEM tiles
               word_hbm,                                  # HBM (V, H) raw ref
               out_ref,                                   # VMEM (1, T, H)
               wrows, sem):                               # (2,T,H) scratch, DMA sems (2,)
        j = pl.program_id(0)                              # sequence-tile index (outer)
        b = pl.program_id(1)                              # batch index (inner, sequential)
        n_b = pl.num_programs(1)
        slot = b % 2

        def issue_gather(batch_idx, dst_slot):
            # T per-row HBM -> VMEM copies, all signalled on sem[dst_slot].
            base = batch_idx * S_pad + j * T
            def body(i, carry):
                rid = wid_ref[base + i]
                pltpu.make_async_copy(
                    word_hbm.at[pl.ds(rid, 1)],
                    wrows.at[dst_slot].at[pl.ds(i, 1)],
                    sem.at[dst_slot]).start()
                return carry
            # Unrolled so scalar address math + descriptor pushes co-issue.
            lax.fori_loop(0, T, body, 0, unroll=8)

        # Prime: the first inner step of each outer tile issues its own gather.
        @pl.when(b == 0)
        def _():
            issue_gather(0, 0)

        # Cross-step prefetch of the NEXT inner step's word rows.
        # NOTE: up to 2*T small DMAs may be in flight on the two semaphores;
        # deep queues only stall the issue path, they do not change results.
        @pl.when(b + 1 < n_b)
        def _():
            issue_gather(b + 1, (b + 1) % 2)

        # One combined wait for all T row copies of the current slot.
        # (DMA sems count bytes; T identical (1,H) copies == one (T,H) descriptor.)
        pltpu.make_async_copy(word_hbm.at[pl.ds(0, T)],
                              wrows.at[slot],
                              sem.at[slot]).wait()

        # Token-type contribution via select against the resident (Vt, H) table.
        tt_ids = tt_ref[0]                                # (T, 1) f32
        ttab = ttab_ref[...].astype(jnp.float32)          # (Vt, H)
        tt_contrib = ttab[0:1, :]
        for v in range(1, Vt):                            # Vt is tiny (e.g. 2)
            tt_contrib = jnp.where(tt_ids == jnp.float32(v), ttab[v:v + 1, :],
                                   tt_contrib)

        # Fused: word rows + position + token type, single f32 (T, H) temporary.
        x = (wrows[slot].astype(jnp.float32)
             + pos_ref[...].astype(jnp.float32)
             + tt_contrib)

        # LayerNorm over H, single-pass statistics (var clamped for robustness).
        s1 = jnp.sum(x, axis=-1, keepdims=True)
        s2 = jnp.sum(x * x, axis=-1, keepdims=True)
        mean = s1 * inv_h
        var = jnp.maximum(s2 * inv_h - mean * mean, 0.0)
        inv = lax.rsqrt(var + LN_EPS)
        y = (x - mean) * inv * gamma_ref[...] + beta_ref[...]

        # Dropout: identity in eval mode.
        out_ref[...] = y[None, :, :].astype(out_ref.dtype)

    grid_spec = pltpu.PrefetchScalarGridSpec(
        num_scalar_prefetch=1,
        grid=(n_blk, B),                                   # seq tiles outer, batch inner
        in_specs=[
            pl.BlockSpec((1, T, 1), lambda j, b, wid: (b, j, 0)),   # token-type id column
            pl.BlockSpec((T, H), lambda j, b, wid: (j, 0)),         # position tile (reused over b)
            pl.BlockSpec((Vt, H), lambda j, b, wid: (0, 0)),        # resident ttype table
            pl.BlockSpec((1, H), lambda j, b, wid: (0, 0)),         # LayerNorm gamma
            pl.BlockSpec((1, H), lambda j, b, wid: (0, 0)),         # LayerNorm beta
            pl.BlockSpec(memory_space=pl.ANY),                      # word table stays in HBM
        ],
        out_specs=pl.BlockSpec((1, T, H), lambda j, b, wid: (b, j, 0)),
        scratch_shapes=[
            pltpu.VMEM((2, T, H), row_dtype),                       # double-buffered word rows
            pltpu.SemaphoreType.DMA((2,)),                          # one DMA sem per slot
        ],
    )

    # Explicit VMEM budget: double-buffered pos/out/wrows tiles + f32 temporaries.
    vmem_need = (2 * T * H * itemsize      # pos tiles
                 + 2 * T * H * itemsize    # out tiles
                 + 2 * T * H * itemsize    # wrows scratch
                 + 2 * T * H * 4           # f32 temporaries
                 + 2 * T * 128 * 4         # token-type id column (lane padded)
                 + 4 * (Vt + 2) * H * 4)   # resident tables + gamma/beta
    vmem_limit = int(min(64 * 2**20, max(32 * 2**20, 2 * vmem_need)))

    out = pl.pallas_call(
        kernel,
        out_shape=jax.ShapeDtypeStruct((B, S_pad, H), out_dtype),
        grid_spec=grid_spec,
        compiler_params=pltpu.CompilerParams(
            # Outer seq-tile axis parallel (v7x 2-TC split); inner batch axis
            # arbitrary so the cross-step gather prefetch order is guaranteed.
            dimension_semantics=("parallel", "arbitrary"),
            vmem_limit_bytes=vmem_limit),
    )(wid_flat, tt_col, pos_slice, ttype_table, gamma2, beta2, word_table)

    if S_pad != S:
        out = out[:, :S, :]
    return out


def reference(input_ids, token_type_ids, position_ids,
              word_table, ttype_table, pos_table, gamma, beta):
    emb = (word_table[input_ids]
           + ttype_table[token_type_ids]
           + pos_table[position_ids][None, :, :])
    mean = emb.mean(-1, keepdims=True)
    var = ((emb - mean) ** 2).mean(-1, keepdims=True)
    return (emb - mean) / jnp.sqrt(var + LN_EPS) * gamma + beta


if __name__ == "__main__":
    # Small synthetic BERT config
    vocab_size = 64
    max_position_embeddings = 32
    type_vocab_size = 2
    hidden_size = 128
    pad_token_id = 0
    B, S = 2, 8
    past_key_values_length = 0

    key = jax.random.PRNGKey(0)
    k = jax.random.split(key, 5)

    # nn.Embedding ~ N(0, 0.02); LayerNorm gamma=1, beta=0; padding_idx row = 0
    word_table = 0.02 * jax.random.normal(k[0], (vocab_size, hidden_size), jnp.float32)
    word_table = word_table.at[pad_token_id].set(0.0)
    pos_table = 0.02 * jax.random.normal(k[1], (max_position_embeddings, hidden_size), jnp.float32)
    ttype_table = 0.02 * jax.random.normal(k[2], (type_vocab_size, hidden_size), jnp.float32)
    gamma = jnp.ones((hidden_size,), jnp.float32)
    beta = jnp.zeros((hidden_size,), jnp.float32)

    # Default forward path: no radical_ids / glyph_embeds given.
    input_ids = jax.random.randint(k[3], (B, S), 0, vocab_size, dtype=jnp.int32)
    token_type_ids = jnp.zeros((B, S), jnp.int32)
    token_type_ids = token_type_ids.at[:, S // 2:].set(1)   # exercise the select path
    position_ids = jnp.arange(past_key_values_length,
                              past_key_values_length + S, dtype=jnp.int32)

    # TODO(synk): 'radical' / 'glyph' config branches (extra embedding + map_fc,
    # glyph weights from torch.load) are not exercised in the default forward path.

    out = bert_embeddings(input_ids, token_type_ids, position_ids,
                          word_table, ttype_table, pos_table, gamma, beta)
    out = jax.block_until_ready(out)

    ref = reference(input_ids, token_type_ids, position_ids,
                    word_table, ttype_table, pos_table, gamma, beta)
    assert out.shape == (B, S, hidden_size)
    assert jnp.allclose(out, ref, atol=1e-5, rtol=1e-5), "mismatch vs reference"
    print("KERNEL_OK")
</pallas_src>

<mosaic_0001>
module attributes {stable_mosaic.version = 11 : i64} {
  func.func @kernel(%arg0: i32, %arg1: i32, %arg2: memref<16xi32, #tpu.memory_space<smem>>, %arg3: memref<1x8x1xf32, #tpu.memory_space<vmem>>, %arg4: memref<8x128xf32, #tpu.memory_space<vmem>>, %arg5: memref<2x128xf32, #tpu.memory_space<vmem>>, %arg6: memref<1x128xf32, #tpu.memory_space<vmem>>, %arg7: memref<1x128xf32, #tpu.memory_space<vmem>>, %arg8: memref<64x128xf32, #tpu.memory_space<any>>, %arg9: memref<1x8x128xf32, #tpu.memory_space<vmem>>, %arg10: memref<2x8x128xf32, #tpu.memory_space<vmem>>, %arg11: memref<2x!tpu.dma_semaphore, #tpu.memory_space<semaphore_mem>>) attributes {dimension_semantics = [#tpu.dimension_semantics<parallel>, #tpu.dimension_semantics<arbitrary>], iteration_bounds = array<i64: 1, 2>, scalar_prefetch = 1 : i64, scratch_operands = 2 : i64, tpu.core_type = #tpu.core_type<tc>, window_params = [{transform_indices = @transform_0, window_bounds = array<i64: 1, 8, 1>}, {transform_indices = @transform_1, window_bounds = array<i64: 8, 128>}, {pipeline_mode = #tpu.pipeline_mode<synchronous>, transform_indices = @transform_2, window_bounds = array<i64: 2, 128>}, {pipeline_mode = #tpu.pipeline_mode<synchronous>, transform_indices = @transform_3, window_bounds = array<i64: 1, 128>}, {pipeline_mode = #tpu.pipeline_mode<synchronous>, transform_indices = @transform_4, window_bounds = array<i64: 1, 128>}, {}, {transform_indices = @transform_6, window_bounds = array<i64: 1, 8, 128>}]} {
    %c2_i32 = arith.constant 2 : i32
    %c0_i32 = arith.constant 0 : i32
    %0 = arith.cmpi eq, %c2_i32, %c0_i32 : i32
    %c1_i32 = arith.constant 1 : i32
    %1 = arith.select %0, %c1_i32, %c2_i32 : i32
    %2 = arith.remsi %arg1, %1 : i32
    %c0_i32_0 = arith.constant 0 : i32
    %3 = arith.cmpi ne, %2, %c0_i32_0 : i32
    %c0_i32_1 = arith.constant 0 : i32
    %4 = arith.cmpi slt, %2, %c0_i32_1 : i32
    %c0_i32_2 = arith.constant 0 : i32
    %5 = arith.cmpi slt, %1, %c0_i32_2 : i32
    %6 = arith.xori %4, %5 : i1
    %7 = arith.andi %6, %3 : i1
    %8 = arith.addi %2, %1 : i32
    %9 = arith.select %7, %8, %2 : i32
    %c0_i32_3 = arith.constant 0 : i32
    %10 = arith.cmpi eq, %arg1, %c0_i32_3 : i32
    %11 = arith.extui %10 : i1 to i32
    %c0_i32_4 = arith.constant 0 : i32
    %12 = arith.cmpi ne, %11, %c0_i32_4 : i32
    scf.if %12 {
      %c8_i32 = arith.constant 8 : i32
      %70 = arith.muli %arg0, %c8_i32 : i32
      %c0_i32_33 = arith.constant 0 : i32
      %71 = arith.addi %c0_i32_33, %70 : i32
      %c0_i32_34 = arith.constant 0 : i32
      %72 = arith.addi %71, %c0_i32_34 : i32
      %73 = arith.index_cast %72 : i32 to index
      %74 = memref.load %arg2[%73] : memref<16xi32, #tpu.memory_space<smem>>
      %c0_i32_35 = arith.constant 0 : i32
      %c0_i32_36 = arith.constant 0 : i32
      %c0_i32_37 = arith.constant 0 : i32
      %75 = tpu.memref_slice %arg8[%74, %c0_i32_37] : memref<64x128xf32, #tpu.memory_space<any>> -> memref<1x128xf32, #tpu.memory_space<any>>
      %c0_i32_38 = arith.constant 0 : i32
      %c0_i32_39 = arith.constant 0 : i32
      %76 = tpu.memref_slice %arg10[%c0_i32_35, %c0_i32_38, %c0_i32_39] : memref<2x8x128xf32, #tpu.memory_space<vmem>> -> memref<1x8x128xf32, #tpu.memory_space<vmem>>
      %77 = tpu.memref_squeeze %76 : memref<1x8x128xf32, #tpu.memory_space<vmem>> -> memref<8x128xf32, #tpu.memory_space<vmem>>
      %c0_i32_40 = arith.constant 0 : i32
      %78 = tpu.memref_slice %77[%c0_i32_34, %c0_i32_40] : memref<8x128xf32, #tpu.memory_space<vmem>> -> memref<1x128xf32, #tpu.memory_space<vmem>>
      %79 = tpu.memref_slice %arg11[%c0_i32_36] : memref<2x!tpu.dma_semaphore, #tpu.memory_space<semaphore_mem>> -> memref<1x!tpu.dma_semaphore, #tpu.memory_space<semaphore_mem>>
      %80 = tpu.memref_squeeze %79 : memref<1x!tpu.dma_semaphore, #tpu.memory_space<semaphore_mem>> -> memref<!tpu.dma_semaphore, #tpu.memory_space<semaphore_mem>>
      tpu.enqueue_dma source(%75 : memref<1x128xf32, #tpu.memory_space<any>>) target(%78 : memref<1x128xf32, #tpu.memory_space<vmem>>) target_semaphore(%80 : memref<!tpu.dma_semaphore, #tpu.memory_space<semaphore_mem>>)
      %c1_i32_41 = arith.constant 1 : i32
      %81 = arith.addi %71, %c1_i32_41 : i32
      %82 = arith.index_cast %81 : i32 to index
      %83 = memref.load %arg2[%82] : memref<16xi32, #tpu.memory_space<smem>>
      %c0_i32_42 = arith.constant 0 : i32
      %c0_i32_43 = arith.constant 0 : i32
      %c0_i32_44 = arith.constant 0 : i32
      %84 = tpu.memref_slice %arg8[%83, %c0_i32_44] : memref<64x128xf32, #tpu.memory_space<any>> -> memref<1x128xf32, #tpu.memory_space<any>>
      %c0_i32_45 = arith.constant 0 : i32
      %c0_i32_46 = arith.constant 0 : i32
      %85 = tpu.memref_slice %arg10[%c0_i32_42, %c0_i32_45, %c0_i32_46] : memref<2x8x128xf32, #tpu.memory_space<vmem>> -> memref<1x8x128xf32, #tpu.memory_space<vmem>>
      %86 = tpu.memref_squeeze %85 : memref<1x8x128xf32, #tpu.memory_space<vmem>> -> memref<8x128xf32, #tpu.memory_space<vmem>>
      %c0_i32_47 = arith.constant 0 : i32
      %87 = tpu.memref_slice %86[%c1_i32_41, %c0_i32_47] : memref<8x128xf32, #tpu.memory_space<vmem>> -> memref<1x128xf32, #tpu.memory_space<vmem>>
      %88 = tpu.memref_slice %arg11[%c0_i32_43] : memref<2x!tpu.dma_semaphore, #tpu.memory_space<semaphore_mem>> -> memref<1x!tpu.dma_semaphore, #tpu.memory_space<semaphore_mem>>
      %89 = tpu.memref_squeeze %88 : memref<1x!tpu.dma_semaphore, #tpu.memory_space<semaphore_mem>> -> memref<!tpu.dma_semaphore, #tpu.memory_space<semaphore_mem>>
      tpu.enqueue_dma source(%84 : memref<1x128xf32, #tpu.memory_space<any>>) target(%87 : memref<1x128xf32, #tpu.memory_space<vmem>>) target_semaphore(%89 : memref<!tpu.dma_semaphore, #tpu.memory_space<semaphore_mem>>)
      %c2_i32_48 = arith.constant 2 : i32
      %90 = arith.addi %71, %c2_i32_48 : i32
      %91 = arith.index_cast %90 : i32 to index
      %92 = memref.load %arg2[%91] : memref<16xi32, #tpu.memory_space<smem>>
      %c0_i32_49 = arith.constant 0 : i32
      %c0_i32_50 = arith.constant 0 : i32
      %c0_i32_51 = arith.constant 0 : i32
      %93 = tpu.memref_slice %arg8[%92, %c0_i32_51] : memref<64x128xf32, #tpu.memory_space<any>> -> memref<1x128xf32, #tpu.memory_space<any>>
      %c0_i32_52 = arith.constant 0 : i32
      %c0_i32_53 = arith.constant 0 : i32
      %94 = tpu.memref_slice %arg10[%c0_i32_49, %c0_i32_52, %c0_i32_53] : memref<2x8x128xf32, #tpu.memory_space<vmem>> -> memref<1x8x128xf32, #tpu.memory_space<vmem>>
      %95 = tpu.memref_squeeze %94 : memref<1x8x128xf32, #tpu.memory_space<vmem>> -> memref<8x128xf32, #tpu.memory_space<vmem>>
      %c0_i32_54 = arith.constant 0 : i32
      %96 = tpu.memref_slice %95[%c2_i32_48, %c0_i32_54] : memref<8x128xf32, #tpu.memory_space<vmem>> -> memref<1x128xf32, #tpu.memory_space<vmem>>
      %97 = tpu.memref_slice %arg11[%c0_i32_50] : memref<2x!tpu.dma_semaphore, #tpu.memory_space<semaphore_mem>> -> memref<1x!tpu.dma_semaphore, #tpu.memory_space<semaphore_mem>>
      %98 = tpu.memref_squeeze %97 : memref<1x!tpu.dma_semaphore, #tpu.memory_space<semaphore_mem>> -> memref<!tpu.dma_semaphore, #tpu.memory_space<semaphore_mem>>
      tpu.enqueue_dma source(%93 : memref<1x128xf32, #tpu.memory_space<any>>) target(%96 : memref<1x128xf32, #tpu.memory_space<vmem>>) target_semaphore(%98 : memref<!tpu.dma_semaphore, #tpu.memory_space<semaphore_mem>>)
      %c3_i32 = arith.constant 3 : i32
      %99 = arith.addi %71, %c3_i32 : i32
      %100 = arith.index_cast %99 : i32 to index
      %101 = memref.load %arg2[%100] : memref<16xi32, #tpu.memory_space<smem>>
      %c0_i32_55 = arith.constant 0 : i32
      %c0_i32_56 = arith.constant 0 : i32
      %c0_i32_57 = arith.constant 0 : i32
      %102 = tpu.memref_slice %arg8[%101, %c0_i32_57] : memref<64x128xf32, #tpu.memory_space<any>> -> memref<1x128xf32, #tpu.memory_space<any>>
      %c0_i32_58 = arith.constant 0 : i32
      %c0_i32_59 = arith.constant 0 : i32
      %103 = tpu.memref_slice %arg10[%c0_i32_55, %c0_i32_58, %c0_i32_59] : memref<2x8x128xf32, #tpu.memory_space<vmem>> -> memref<1x8x128xf32, #tpu.memory_space<vmem>>
      %104 = tpu.memref_squeeze %103 : memref<1x8x128xf32, #tpu.memory_space<vmem>> -> memref<8x128xf32, #tpu.memory_space<vmem>>
      %c0_i32_60 = arith.constant 0 : i32
      %105 = tpu.memref_slice %104[%c3_i32, %c0_i32_60] : memref<8x128xf32, #tpu.memory_space<vmem>> -> memref<1x128xf32, #tpu.memory_space<vmem>>
      %106 = tpu.memref_slice %arg11[%c0_i32_56] : memref<2x!tpu.dma_semaphore, #tpu.memory_space<semaphore_mem>> -> memref<1x!tpu.dma_semaphore, #tpu.memory_space<semaphore_mem>>
      %107 = tpu.memref_squeeze %106 : memref<1x!tpu.dma_semaphore, #tpu.memory_space<semaphore_mem>> -> memref<!tpu.dma_semaphore, #tpu.memory_space<semaphore_mem>>
      tpu.enqueue_dma source(%102 : memref<1x128xf32, #tpu.memory_space<any>>) target(%105 : memref<1x128xf32, #tpu.memory_space<vmem>>) target_semaphore(%107 : memref<!tpu.dma_semaphore, #tpu.memory_space<semaphore_mem>>)
      %c4_i32 = arith.constant 4 : i32
      %108 = arith.addi %71, %c4_i32 : i32
      %109 = arith.index_cast %108 : i32 to index
      %110 = memref.load %arg2[%109] : memref<16xi32, #tpu.memory_space<smem>>
      %c0_i32_61 = arith.constant 0 : i32
      %c0_i32_62 = arith.constant 0 : i32
      %c0_i32_63 = arith.constant 0 : i32
      %111 = tpu.memref_slice %arg8[%110, %c0_i32_63] : memref<64x128xf32, #tpu.memory_space<any>> -> memref<1x128xf32, #tpu.memory_space<any>>
      %c0_i32_64 = arith.constant 0 : i32
      %c0_i32_65 = arith.constant 0 : i32
      %112 = tpu.memref_slice %arg10[%c0_i32_61, %c0_i32_64, %c0_i32_65] : memref<2x8x128xf32, #tpu.memory_space<vmem>> -> memref<1x8x128xf32, #tpu.memory_space<vmem>>
      %113 = tpu.memref_squeeze %112 : memref<1x8x128xf32, #tpu.memory_space<vmem>> -> memref<8x128xf32, #tpu.memory_space<vmem>>
      %c0_i32_66 = arith.constant 0 : i32
      %114 = tpu.memref_slice %113[%c4_i32, %c0_i32_66] : memref<8x128xf32, #tpu.memory_space<vmem>> -> memref<1x128xf32, #tpu.memory_space<vmem>>
      %115 = tpu.memref_slice %arg11[%c0_i32_62] : memref<2x!tpu.dma_semaphore, #tpu.memory_space<semaphore_mem>> -> memref<1x!tpu.dma_semaphore, #tpu.memory_space<semaphore_mem>>
      %116 = tpu.memref_squeeze %115 : memref<1x!tpu.dma_semaphore, #tpu.memory_space<semaphore_mem>> -> memref<!tpu.dma_semaphore, #tpu.memory_space<semaphore_mem>>
      tpu.enqueue_dma source(%111 : memref<1x128xf32, #tpu.memory_space<any>>) target(%114 : memref<1x128xf32, #tpu.memory_space<vmem>>) target_semaphore(%116 : memref<!tpu.dma_semaphore, #tpu.memory_space<semaphore_mem>>)
      %c5_i32 = arith.constant 5 : i32
      %117 = arith.addi %71, %c5_i32 : i32
      %118 = arith.index_cast %117 : i32 to index
      %119 = memref.load %arg2[%118] : memref<16xi32, #tpu.memory_space<smem>>
      %c0_i32_67 = arith.constant 0 : i32
      %c0_i32_68 = arith.constant 0 : i32
      %c0_i32_69 = arith.constant 0 : i32
      %120 = tpu.memref_slice %arg8[%119, %c0_i32_69] : memref<64x128xf32, #tpu.memory_space<any>> -> memref<1x128xf32, #tpu.memory_space<any>>
      %c0_i32_70 = arith.constant 0 : i32
      %c0_i32_71 = arith.constant 0 : i32
      %121 = tpu.memref_slice %arg10[%c0_i32_67, %c0_i32_70, %c0_i32_71] : memref<2x8x128xf32, #tpu.memory_space<vmem>> -> memref<1x8x128xf32, #tpu.memory_space<vmem>>
      %122 = tpu.memref_squeeze %121 : memref<1x8x128xf32, #tpu.memory_space<vmem>> -> memref<8x128xf32, #tpu.memory_space<vmem>>
      %c0_i32_72 = arith.constant 0 : i32
      %123 = tpu.memref_slice %122[%c5_i32, %c0_i32_72] : memref<8x128xf32, #tpu.memory_space<vmem>> -> memref<1x128xf32, #tpu.memory_space<vmem>>
      %124 = tpu.memref_slice %arg11[%c0_i32_68] : memref<2x!tpu.dma_semaphore, #tpu.memory_space<semaphore_mem>> -> memref<1x!tpu.dma_semaphore, #tpu.memory_space<semaphore_mem>>
      %125 = tpu.memref_squeeze %124 : memref<1x!tpu.dma_semaphore, #tpu.memory_space<semaphore_mem>> -> memref<!tpu.dma_semaphore, #tpu.memory_space<semaphore_mem>>
      tpu.enqueue_dma source(%120 : memref<1x128xf32, #tpu.memory_space<any>>) target(%123 : memref<1x128xf32, #tpu.memory_space<vmem>>) target_semaphore(%125 : memref<!tpu.dma_semaphore, #tpu.memory_space<semaphore_mem>>)
      %c6_i32 = arith.constant 6 : i32
      %126 = arith.addi %71, %c6_i32 : i32
      %127 = arith.index_cast %126 : i32 to index
      %128 = memref.load %arg2[%127] : memref<16xi32, #tpu.memory_space<smem>>
      %c0_i32_73 = arith.constant 0 : i32
      %c0_i32_74 = arith.constant 0 : i32
      %c0_i32_75 = arith.constant 0 : i32
      %129 = tpu.memref_slice %arg8[%128, %c0_i32_75] : memref<64x128xf32, #tpu.memory_space<any>> -> memref<1x128xf32, #tpu.memory_space<any>>
      %c0_i32_76 = arith.constant 0 : i32
      %c0_i32_77 = arith.constant 0 : i32
      %130 = tpu.memref_slice %arg10[%c0_i32_73, %c0_i32_76, %c0_i32_77] : memref<2x8x128xf32, #tpu.memory_space<vmem>> -> memref<1x8x128xf32, #tpu.memory_space<vmem>>
      %131 = tpu.memref_squeeze %130 : memref<1x8x128xf32, #tpu.memory_space<vmem>> -> memref<8x128xf32, #tpu.memory_space<vmem>>
      %c0_i32_78 = arith.constant 0 : i32
      %132 = tpu.memref_slice %131[%c6_i32, %c0_i32_78] : memref<8x128xf32, #tpu.memory_space<vmem>> -> memref<1x128xf32, #tpu.memory_space<vmem>>
      %133 = tpu.memref_slice %arg11[%c0_i32_74] : memref<2x!tpu.dma_semaphore, #tpu.memory_space<semaphore_mem>> -> memref<1x!tpu.dma_semaphore, #tpu.memory_space<semaphore_mem>>
      %134 = tpu.memref_squeeze %133 : memref<1x!tpu.dma_semaphore, #tpu.memory_space<semaphore_mem>> -> memref<!tpu.dma_semaphore, #tpu.memory_space<semaphore_mem>>
      tpu.enqueue_dma source(%129 : memref<1x128xf32, #tpu.memory_space<any>>) target(%132 : memref<1x128xf32, #tpu.memory_space<vmem>>) target_semaphore(%134 : memref<!tpu.dma_semaphore, #tpu.memory_space<semaphore_mem>>)
      %c7_i32 = arith.constant 7 : i32
      %135 = arith.addi %71, %c7_i32 : i32
      %136 = arith.index_cast %135 : i32 to index
      %137 = memref.load %arg2[%136] : memref<16xi32, #tpu.memory_space<smem>>
      %c0_i32_79 = arith.constant 0 : i32
      %c0_i32_80 = arith.constant 0 : i32
      %c0_i32_81 = arith.constant 0 : i32
      %138 = tpu.memref_slice %arg8[%137, %c0_i32_81] : memref<64x128xf32, #tpu.memory_space<any>> -> memref<1x128xf32, #tpu.memory_space<any>>
      %c0_i32_82 = arith.constant 0 : i32
      %c0_i32_83 = arith.constant 0 : i32
      %139 = tpu.memref_slice %arg10[%c0_i32_79, %c0_i32_82, %c0_i32_83] : memref<2x8x128xf32, #tpu.memory_space<vmem>> -> memref<1x8x128xf32, #tpu.memory_space<vmem>>
      %140 = tpu.memref_squeeze %139 : memref<1x8x128xf32, #tpu.memory_space<vmem>> -> memref<8x128xf32, #tpu.memory_space<vmem>>
      %c0_i32_84 = arith.constant 0 : i32
      %141 = tpu.memref_slice %140[%c7_i32, %c0_i32_84] : memref<8x128xf32, #tpu.memory_space<vmem>> -> memref<1x128xf32, #tpu.memory_space<vmem>>
      %142 = tpu.memref_slice %arg11[%c0_i32_80] : memref<2x!tpu.dma_semaphore, #tpu.memory_space<semaphore_mem>> -> memref<1x!tpu.dma_semaphore, #tpu.memory_space<semaphore_mem>>
      %143 = tpu.memref_squeeze %142 : memref<1x!tpu.dma_semaphore, #tpu.memory_space<semaphore_mem>> -> memref<!tpu.dma_semaphore, #tpu.memory_space<semaphore_mem>>
      tpu.enqueue_dma source(%138 : memref<1x128xf32, #tpu.memory_space<any>>) target(%141 : memref<1x128xf32, #tpu.memory_space<vmem>>) target_semaphore(%143 : memref<!tpu.dma_semaphore, #tpu.memory_space<semaphore_mem>>)
      %c8_i32_85 = arith.constant 8 : i32
    } else {
    }
    %c1_i32_5 = arith.constant 1 : i32
    %13 = arith.addi %arg1, %c1_i32_5 : i32
    %c2_i32_6 = arith.constant 2 : i32
    %14 = arith.cmpi slt, %13, %c2_i32_6 : i32
    %15 = arith.extui %14 : i1 to i32
    %c0_i32_7 = arith.constant 0 : i32
    %16 = arith.cmpi ne, %15, %c0_i32_7 : i32
    scf.if %16 {
      %c1_i32_33 = arith.constant 1 : i32
      %70 = arith.addi %arg1, %c1_i32_33 : i32
      %c1_i32_34 = arith.constant 1 : i32
      %71 = arith.addi %arg1, %c1_i32_34 : i32
      %c2_i32_35 = arith.constant 2 : i32
      %c0_i32_36 = arith.constant 0 : i32
      %72 = arith.cmpi eq, %c2_i32_35, %c0_i32_36 : i32
      %c1_i32_37 = arith.constant 1 : i32
      %73 = arith.select %72, %c1_i32_37, %c2_i32_35 : i32
      %74 = arith.remsi %71, %73 : i32
      %c0_i32_38 = arith.constant 0 : i32
      %75 = arith.cmpi ne, %74, %c0_i32_38 : i32
      %c0_i32_39 = arith.constant 0 : i32
      %76 = arith.cmpi slt, %74, %c0_i32_39 : i32
      %c0_i32_40 = arith.constant 0 : i32
      %77 = arith.cmpi slt, %73, %c0_i32_40 : i32
      %78 = arith.xori %76, %77 : i1
      %79 = arith.andi %78, %75 : i1
      %80 = arith.addi %74, %73 : i32
      %81 = arith.select %79, %80, %74 : i32
      %c8_i32 = arith.constant 8 : i32
      %82 = arith.muli %70, %c8_i32 : i32
      %c8_i32_41 = arith.constant 8 : i32
      %83 = arith.muli %arg0, %c8_i32_41 : i32
      %84 = arith.addi %82, %83 : i32
      %c0_i32_42 = arith.constant 0 : i32
      %85 = arith.addi %84, %c0_i32_42 : i32
      %86 = arith.index_cast %85 : i32 to index
      %87 = memref.load %arg2[%86] : memref<16xi32, #tpu.memory_space<smem>>
      %c0_i32_43 = arith.constant 0 : i32
      %88 = tpu.memref_slice %arg8[%87, %c0_i32_43] : memref<64x128xf32, #tpu.memory_space<any>> -> memref<1x128xf32, #tpu.memory_space<any>>
      %c0_i32_44 = arith.constant 0 : i32
      %c0_i32_45 = arith.constant 0 : i32
      %89 = tpu.memref_slice %arg10[%81, %c0_i32_44, %c0_i32_45] : memref<2x8x128xf32, #tpu.memory_space<vmem>> -> memref<1x8x128xf32, #tpu.memory_space<vmem>>
      %90 = tpu.memref_squeeze %89 : memref<1x8x128xf32, #tpu.memory_space<vmem>> -> memref<8x128xf32, #tpu.memory_space<vmem>>
      %c0_i32_46 = arith.constant 0 : i32
      %91 = tpu.memref_slice %90[%c0_i32_42, %c0_i32_46] : memref<8x128xf32, #tpu.memory_space<vmem>> -> memref<1x128xf32, #tpu.memory_space<vmem>>
      %92 = tpu.memref_slice %arg11[%81] : memref<2x!tpu.dma_semaphore, #tpu.memory_space<semaphore_mem>> -> memref<1x!tpu.dma_semaphore, #tpu.memory_space<semaphore_mem>>
      %93 = tpu.memref_squeeze %92 : memref<1x!tpu.dma_semaphore, #tpu.memory_space<semaphore_mem>> -> memref<!tpu.dma_semaphore, #tpu.memory_space<semaphore_mem>>
      tpu.enqueue_dma source(%88 : memref<1x128xf32, #tpu.memory_space<any>>) target(%91 : memref<1x128xf32, #tpu.memory_space<vmem>>) target_semaphore(%93 : memref<!tpu.dma_semaphore, #tpu.memory_space<semaphore_mem>>)
      %c1_i32_47 = arith.constant 1 : i32
      %94 = arith.addi %84, %c1_i32_47 : i32
      %95 = arith.index_cast %94 : i32 to index
      %96 = memref.load %arg2[%95] : memref<16xi32, #tpu.memory_space<smem>>
      %c0_i32_48 = arith.constant 0 : i32
      %97 = tpu.memref_slice %arg8[%96, %c0_i32_48] : memref<64x128xf32, #tpu.memory_space<any>> -> memref<1x128xf32, #tpu.memory_space<any>>
      %c0_i32_49 = arith.constant 0 : i32
      %c0_i32_50 = arith.constant 0 : i32
      %98 = tpu.memref_slice %arg10[%81, %c0_i32_49, %c0_i32_50] : memref<2x8x128xf32, #tpu.memory_space<vmem>> -> memref<1x8x128xf32, #tpu.memory_space<vmem>>
      %99 = tpu.memref_squeeze %98 : memref<1x8x128xf32, #tpu.memory_space<vmem>> -> memref<8x128xf32, #tpu.memory_space<vmem>>
      %c0_i32_51 = arith.constant 0 : i32
      %100 = tpu.memref_slice %99[%c1_i32_47, %c0_i32_51] : memref<8x128xf32, #tpu.memory_space<vmem>> -> memref<1x128xf32, #tpu.memory_space<vmem>>
      %101 = tpu.memref_slice %arg11[%81] : memref<2x!tpu.dma_semaphore, #tpu.memory_space<semaphore_mem>> -> memref<1x!tpu.dma_semaphore, #tpu.memory_space<semaphore_mem>>
      %102 = tpu.memref_squeeze %101 : memref<1x!tpu.dma_semaphore, #tpu.memory_space<semaphore_mem>> -> memref<!tpu.dma_semaphore, #tpu.memory_space<semaphore_mem>>
      tpu.enqueue_dma source(%97 : memref<1x128xf32, #tpu.memory_space<any>>) target(%100 : memref<1x128xf32, #tpu.memory_space<vmem>>) target_semaphore(%102 : memref<!tpu.dma_semaphore, #tpu.memory_space<semaphore_mem>>)
      %c2_i32_52 = arith.constant 2 : i32
      %103 = arith.addi %84, %c2_i32_52 : i32
      %104 = arith.index_cast %103 : i32 to index
      %105 = memref.load %arg2[%104] : memref<16xi32, #tpu.memory_space<smem>>
      %c0_i32_53 = arith.constant 0 : i32
      %106 = tpu.memref_slice %arg8[%105, %c0_i32_53] : memref<64x128xf32, #tpu.memory_space<any>> -> memref<1x128xf32, #tpu.memory_space<any>>
      %c0_i32_54 = arith.constant 0 : i32
      %c0_i32_55 = arith.constant 0 : i32
      %107 = tpu.memref_slice %arg10[%81, %c0_i32_54, %c0_i32_55] : memref<2x8x128xf32, #tpu.memory_space<vmem>> -> memref<1x8x128xf32, #tpu.memory_space<vmem>>
      %108 = tpu.memref_squeeze %107 : memref<1x8x128xf32, #tpu.memory_space<vmem>> -> memref<8x128xf32, #tpu.memory_space<vmem>>
      %c0_i32_56 = arith.constant 0 : i32
      %109 = tpu.memref_slice %108[%c2_i32_52, %c0_i32_56] : memref<8x128xf32, #tpu.memory_space<vmem>> -> memref<1x128xf32, #tpu.memory_space<vmem>>
      %110 = tpu.memref_slice %arg11[%81] : memref<2x!tpu.dma_semaphore, #tpu.memory_space<semaphore_mem>> -> memref<1x!tpu.dma_semaphore, #tpu.memory_space<semaphore_mem>>
      %111 = tpu.memref_squeeze %110 : memref<1x!tpu.dma_semaphore, #tpu.memory_space<semaphore_mem>> -> memref<!tpu.dma_semaphore, #tpu.memory_space<semaphore_mem>>
      tpu.enqueue_dma source(%106 : memref<1x128xf32, #tpu.memory_space<any>>) target(%109 : memref<1x128xf32, #tpu.memory_space<vmem>>) target_semaphore(%111 : memref<!tpu.dma_semaphore, #tpu.memory_space<semaphore_mem>>)
      %c3_i32 = arith.constant 3 : i32
      %112 = arith.addi %84, %c3_i32 : i32
      %113 = arith.index_cast %112 : i32 to index
      %114 = memref.load %arg2[%113] : memref<16xi32, #tpu.memory_space<smem>>
      %c0_i32_57 = arith.constant 0 : i32
      %115 = tpu.memref_slice %arg8[%114, %c0_i32_57] : memref<64x128xf32, #tpu.memory_space<any>> -> memref<1x128xf32, #tpu.memory_space<any>>
      %c0_i32_58 = arith.constant 0 : i32
      %c0_i32_59 = arith.constant 0 : i32
      %116 = tpu.memref_slice %arg10[%81, %c0_i32_58, %c0_i32_59] : memref<2x8x128xf32, #tpu.memory_space<vmem>> -> memref<1x8x128xf32, #tpu.memory_space<vmem>>
      %117 = tpu.memref_squeeze %116 : memref<1x8x128xf32, #tpu.memory_space<vmem>> -> memref<8x128xf32, #tpu.memory_space<vmem>>
      %c0_i32_60 = arith.constant 0 : i32
      %118 = tpu.memref_slice %117[%c3_i32, %c0_i32_60] : memref<8x128xf32, #tpu.memory_space<vmem>> -> memref<1x128xf32, #tpu.memory_space<vmem>>
      %119 = tpu.memref_slice %arg11[%81] : memref<2x!tpu.dma_semaphore, #tpu.memory_space<semaphore_mem>> -> memref<1x!tpu.dma_semaphore, #tpu.memory_space<semaphore_mem>>
      %120 = tpu.memref_squeeze %119 : memref<1x!tpu.dma_semaphore, #tpu.memory_space<semaphore_mem>> -> memref<!tpu.dma_semaphore, #tpu.memory_space<semaphore_mem>>
      tpu.enqueue_dma source(%115 : memref<1x128xf32, #tpu.memory_space<any>>) target(%118 : memref<1x128xf32, #tpu.memory_space<vmem>>) target_semaphore(%120 : memref<!tpu.dma_semaphore, #tpu.memory_space<semaphore_mem>>)
      %c4_i32 = arith.constant 4 : i32
      %121 = arith.addi %84, %c4_i32 : i32
      %122 = arith.index_cast %121 : i32 to index
      %123 = memref.load %arg2[%122] : memref<16xi32, #tpu.memory_space<smem>>
      %c0_i32_61 = arith.constant 0 : i32
      %124 = tpu.memref_slice %arg8[%123, %c0_i32_61] : memref<64x128xf32, #tpu.memory_space<any>> -> memref<1x128xf32, #tpu.memory_space<any>>
      %c0_i32_62 = arith.constant 0 : i32
      %c0_i32_63 = arith.constant 0 : i32
      %125 = tpu.memref_slice %arg10[%81, %c0_i32_62, %c0_i32_63] : memref<2x8x128xf32, #tpu.memory_space<vmem>> -> memref<1x8x128xf32, #tpu.memory_space<vmem>>
      %126 = tpu.memref_squeeze %125 : memref<1x8x128xf32, #tpu.memory_space<vmem>> -> memref<8x128xf32, #tpu.memory_space<vmem>>
      %c0_i32_64 = arith.constant 0 : i32
      %127 = tpu.memref_slice %126[%c4_i32, %c0_i32_64] : memref<8x128xf32, #tpu.memory_space<vmem>> -> memref<1x128xf32, #tpu.memory_space<vmem>>
      %128 = tpu.memref_slice %arg11[%81] : memref<2x!tpu.dma_semaphore, #tpu.memory_space<semaphore_mem>> -> memref<1x!tpu.dma_semaphore, #tpu.memory_space<semaphore_mem>>
      %129 = tpu.memref_squeeze %128 : memref<1x!tpu.dma_semaphore, #tpu.memory_space<semaphore_mem>> -> memref<!tpu.dma_semaphore, #tpu.memory_space<semaphore_mem>>
      tpu.enqueue_dma source(%124 : memref<1x128xf32, #tpu.memory_space<any>>) target(%127 : memref<1x128xf32, #tpu.memory_space<vmem>>) target_semaphore(%129 : memref<!tpu.dma_semaphore, #tpu.memory_space<semaphore_mem>>)
      %c5_i32 = arith.constant 5 : i32
      %130 = arith.addi %84, %c5_i32 : i32
      %131 = arith.index_cast %130 : i32 to index
      %132 = memref.load %arg2[%131] : memref<16xi32, #tpu.memory_space<smem>>
      %c0_i32_65 = arith.constant 0 : i32
      %133 = tpu.memref_slice %arg8[%132, %c0_i32_65] : memref<64x128xf32, #tpu.memory_space<any>> -> memref<1x128xf32, #tpu.memory_space<any>>
      %c0_i32_66 = arith.constant 0 : i32
      %c0_i32_67 = arith.constant 0 : i32
      %134 = tpu.memref_slice %arg10[%81, %c0_i32_66, %c0_i32_67] : memref<2x8x128xf32, #tpu.memory_space<vmem>> -> memref<1x8x128xf32, #tpu.memory_space<vmem>>
      %135 = tpu.memref_squeeze %134 : memref<1x8x128xf32, #tpu.memory_space<vmem>> -> memref<8x128xf32, #tpu.memory_space<vmem>>
      %c0_i32_68 = arith.constant 0 : i32
      %136 = tpu.memref_slice %135[%c5_i32, %c0_i32_68] : memref<8x128xf32, #tpu.memory_space<vmem>> -> memref<1x128xf32, #tpu.memory_space<vmem>>
      %137 = tpu.memref_slice %arg11[%81] : memref<2x!tpu.dma_semaphore, #tpu.memory_space<semaphore_mem>> -> memref<1x!tpu.dma_semaphore, #tpu.memory_space<semaphore_mem>>
      %138 = tpu.memref_squeeze %137 : memref<1x!tpu.dma_semaphore, #tpu.memory_space<semaphore_mem>> -> memref<!tpu.dma_semaphore, #tpu.memory_space<semaphore_mem>>
      tpu.enqueue_dma source(%133 : memref<1x128xf32, #tpu.memory_space<any>>) target(%136 : memref<1x128xf32, #tpu.memory_space<vmem>>) target_semaphore(%138 : memref<!tpu.dma_semaphore, #tpu.memory_space<semaphore_mem>>)
      %c6_i32 = arith.constant 6 : i32
      %139 = arith.addi %84, %c6_i32 : i32
      %140 = arith.index_cast %139 : i32 to index
      %141 = memref.load %arg2[%140] : memref<16xi32, #tpu.memory_space<smem>>
      %c0_i32_69 = arith.constant 0 : i32
      %142 = tpu.memref_slice %arg8[%141, %c0_i32_69] : memref<64x128xf32, #tpu.memory_space<any>> -> memref<1x128xf32, #tpu.memory_space<any>>
      %c0_i32_70 = arith.constant 0 : i32
      %c0_i32_71 = arith.constant 0 : i32
      %143 = tpu.memref_slice %arg10[%81, %c0_i32_70, %c0_i32_71] : memref<2x8x128xf32, #tpu.memory_space<vmem>> -> memref<1x8x128xf32, #tpu.memory_space<vmem>>
      %144 = tpu.memref_squeeze %143 : memref<1x8x128xf32, #tpu.memory_space<vmem>> -> memref<8x128xf32, #tpu.memory_space<vmem>>
      %c0_i32_72 = arith.constant 0 : i32
      %145 = tpu.memref_slice %144[%c6_i32, %c0_i32_72] : memref<8x128xf32, #tpu.memory_space<vmem>> -> memref<1x128xf32, #tpu.memory_space<vmem>>
      %146 = tpu.memref_slice %arg11[%81] : memref<2x!tpu.dma_semaphore, #tpu.memory_space<semaphore_mem>> -> memref<1x!tpu.dma_semaphore, #tpu.memory_space<semaphore_mem>>
      %147 = tpu.memref_squeeze %146 : memref<1x!tpu.dma_semaphore, #tpu.memory_space<semaphore_mem>> -> memref<!tpu.dma_semaphore, #tpu.memory_space<semaphore_mem>>
      tpu.enqueue_dma source(%142 : memref<1x128xf32, #tpu.memory_space<any>>) target(%145 : memref<1x128xf32, #tpu.memory_space<vmem>>) target_semaphore(%147 : memref<!tpu.dma_semaphore, #tpu.memory_space<semaphore_mem>>)
      %c7_i32 = arith.constant 7 : i32
      %148 = arith.addi %84, %c7_i32 : i32
      %149 = arith.index_cast %148 : i32 to index
      %150 = memref.load %arg2[%149] : memref<16xi32, #tpu.memory_space<smem>>
      %c0_i32_73 = arith.constant 0 : i32
      %151 = tpu.memref_slice %arg8[%150, %c0_i32_73] : memref<64x128xf32, #tpu.memory_space<any>> -> memref<1x128xf32, #tpu.memory_space<any>>
      %c0_i32_74 = arith.constant 0 : i32
      %c0_i32_75 = arith.constant 0 : i32
      %152 = tpu.memref_slice %arg10[%81, %c0_i32_74, %c0_i32_75] : memref<2x8x128xf32, #tpu.memory_space<vmem>> -> memref<1x8x128xf32, #tpu.memory_space<vmem>>
      %153 = tpu.memref_squeeze %152 : memref<1x8x128xf32, #tpu.memory_space<vmem>> -> memref<8x128xf32, #tpu.memory_space<vmem>>
      %c0_i32_76 = arith.constant 0 : i32
      %154 = tpu.memref_slice %153[%c7_i32, %c0_i32_76] : memref<8x128xf32, #tpu.memory_space<vmem>> -> memref<1x128xf32, #tpu.memory_space<vmem>>
      %155 = tpu.memref_slice %arg11[%81] : memref<2x!tpu.dma_semaphore, #tpu.memory_space<semaphore_mem>> -> memref<1x!tpu.dma_semaphore, #tpu.memory_space<semaphore_mem>>
      %156 = tpu.memref_squeeze %155 : memref<1x!tpu.dma_semaphore, #tpu.memory_space<semaphore_mem>> -> memref<!tpu.dma_semaphore, #tpu.memory_space<semaphore_mem>>
      tpu.enqueue_dma source(%151 : memref<1x128xf32, #tpu.memory_space<any>>) target(%154 : memref<1x128xf32, #tpu.memory_space<vmem>>) target_semaphore(%156 : memref<!tpu.dma_semaphore, #tpu.memory_space<semaphore_mem>>)
      %c8_i32_77 = arith.constant 8 : i32
    } else {
    }
    %c0_i32_8 = arith.constant 0 : i32
    %c0_i32_9 = arith.constant 0 : i32
    %17 = tpu.memref_slice %arg8[%c0_i32_8, %c0_i32_9] : memref<64x128xf32, #tpu.memory_space<any>> -> memref<8x128xf32, #tpu.memory_space<any>>
    %c0_i32_10 = arith.constant 0 : i32
    %c0_i32_11 = arith.constant 0 : i32
    %18 = tpu.memref_slice %arg10[%9, %c0_i32_10, %c0_i32_11] : memref<2x8x128xf32, #tpu.memory_space<vmem>> -> memref<1x8x128xf32, #tpu.memory_space<vmem>>
    %19 = tpu.memref_squeeze %18 : memref<1x8x128xf32, #tpu.memory_space<vmem>> -> memref<8x128xf32, #tpu.memory_space<vmem>>
    %20 = tpu.memref_slice %arg11[%9] : memref<2x!tpu.dma_semaphore, #tpu.memory_space<semaphore_mem>> -> memref<1x!tpu.dma_semaphore, #tpu.memory_space<semaphore_mem>>
    %21 = tpu.memref_squeeze %20 : memref<1x!tpu.dma_semaphore, #tpu.memory_space<semaphore_mem>> -> memref<!tpu.dma_semaphore, #tpu.memory_space<semaphore_mem>>
    tpu.wait_dma2 semaphore(%21 : memref<!tpu.dma_semaphore, #tpu.memory_space<semaphore_mem>>) src(%17 : memref<8x128xf32, #tpu.memory_space<any>>) dst(%19 : memref<8x128xf32, #tpu.memory_space<vmem>>)
    %c0 = arith.constant 0 : index
    %c0_12 = arith.constant 0 : index
    %c0_13 = arith.constant 0 : index
    %22 = vector.load %arg3[%c0, %c0_12, %c0_13] : memref<1x8x1xf32, #tpu.memory_space<vmem>>, vector<1x8x1xf32>
    %23 = vector.shape_cast %22 : vector<1x8x1xf32> to vector<8x1xf32>
    %c0_14 = arith.constant 0 : index
    %c0_15 = arith.constant 0 : index
    %24 = vector.load %arg5[%c0_14, %c0_15] : memref<2x128xf32, #tpu.memory_space<vmem>>, vector<2x128xf32>
    %25 = vector.extract_strided_slice %24 {offsets = [0, 0], sizes = [1, 128], strides = [1, 1]} : vector<2x128xf32> to vector<1x128xf32>
    %cst = arith.constant 1.000000e+00 : f32
    %26 = vector.broadcast %cst : f32 to vector<8x1xf32>
    %27 = arith.cmpf oeq, %23, %26 : vector<8x1xf32>
    %28 = vector.extract_strided_slice %24 {offsets = [1, 0], sizes = [1, 128], strides = [1, 1]} : vector<2x128xf32> to vector<1x128xf32>
    %29 = vector.shape_cast %27 : vector<8x1xi1> to vector<8x1xi1>
    %30 = vector.broadcast %29 : vector<8x1xi1> to vector<8x128xi1>
    %31 = vector.shape_cast %28 : vector<1x128xf32> to vector<1x128xf32>
    %32 = vector.broadcast %31 : vector<1x128xf32> to vector<8x128xf32>
    %33 = vector.shape_cast %25 : vector<1x128xf32> to vector<1x128xf32>
    %34 = vector.broadcast %33 : vector<1x128xf32> to vector<8x128xf32>
    %35 = arith.select %30, %32, %34 : vector<8x128xi1>, vector<8x128xf32>
    %36 = arith.index_cast %9 : i32 to index
    %c0_16 = arith.constant 0 : index
    %c0_17 = arith.constant 0 : index
    %37 = vector.load %arg10[%36, %c0_16, %c0_17] : memref<2x8x128xf32, #tpu.memory_space<vmem>>, vector<1x8x128xf32>
    %38 = vector.shape_cast %37 : vector<1x8x128xf32> to vector<8x128xf32>
    %c0_18 = arith.constant 0 : index
    %c0_19 = arith.constant 0 : index
    %39 = vector.load %arg4[%c0_18, %c0_19] : memref<8x128xf32, #tpu.memory_space<vmem>>, vector<8x128xf32>
    %40 = arith.addf %38, %39 : vector<8x128xf32>
    %41 = arith.addf %40, %35 : vector<8x128xf32>
    %cst_20 = arith.constant dense<0.000000e+00> : vector<8xf32>
    %42 = vector.multi_reduction <add>, %41, %cst_20 [1] : vector<8x128xf32> to vector<8xf32>
    %43 = vector.shape_cast %42 : vector<8xf32> to vector<8x1xf32>
    %44 = arith.mulf %41, %41 : vector<8x128xf32>
    %cst_21 = arith.constant dense<0.000000e+00> : vector<8xf32>
    %45 = vector.multi_reduction <add>, %44, %cst_21 [1] : vector<8x128xf32> to vector<8xf32>
    %46 = vector.shape_cast %45 : vector<8xf32> to vector<8x1xf32>
    %cst_22 = arith.constant 7.812500e-03 : f32
    %47 = vector.broadcast %cst_22 : f32 to vector<8x1xf32>
    %48 = arith.mulf %43, %47 : vector<8x1xf32>
    %cst_23 = arith.constant 7.812500e-03 : f32
    %49 = vector.broadcast %cst_23 : f32 to vector<8x1xf32>
    %50 = arith.mulf %46, %49 : vector<8x1xf32>
    %51 = arith.mulf %48, %48 : vector<8x1xf32>
    %52 = arith.subf %50, %51 : vector<8x1xf32>
    %cst_24 = arith.constant 0.000000e+00 : f32
    %53 = vector.broadcast %cst_24 : f32 to vector<8x1xf32>
    %54 = arith.maximumf %52, %53 : vector<8x1xf32>
    %cst_25 = arith.constant 9.99999996E-13 : f32
    %55 = vector.broadcast %cst_25 : f32 to vector<8x1xf32>
    %56 = arith.addf %54, %55 : vector<8x1xf32>
    %57 = math.rsqrt %56 : vector<8x1xf32>
    %58 = vector.broadcast %48 : vector<8x1xf32> to vector<8x128xf32>
    %59 = arith.subf %41, %58 : vector<8x128xf32>
    %60 = vector.broadcast %57 : vector<8x1xf32> to vector<8x128xf32>
    %61 = arith.mulf %59, %60 : vector<8x128xf32>
    %c0_26 = arith.constant 0 : index
    %c0_27 = arith.constant 0 : index
    %62 = vector.load %arg6[%c0_26, %c0_27] : memref<1x128xf32, #tpu.memory_space<vmem>>, vector<1x128xf32>
    %63 = vector.broadcast %62 : vector<1x128xf32> to vector<8x128xf32>
    %64 = arith.mulf %61, %63 : vector<8x128xf32>
    %c0_28 = arith.constant 0 : index
    %c0_29 = arith.constant 0 : index
    %65 = vector.load %arg7[%c0_28, %c0_29] : memref<1x128xf32, #tpu.memory_space<vmem>>, vector<1x128xf32>
    %66 = vector.broadcast %65 : vector<1x128xf32> to vector<8x128xf32>
    %67 = arith.addf %64, %66 : vector<8x128xf32>
    %68 = vector.shape_cast %67 : vector<8x128xf32> to vector<1x8x128xf32>
    %c0_30 = arith.constant 0 : index
    %c0_31 = arith.constant 0 : index
    %c0_32 = arith.constant 0 : index
    %69 = vector.load %arg9[%c0_30, %c0_31, %c0_32] : memref<1x8x128xf32, #tpu.memory_space<vmem>>, vector<1x8x128xf32>
    tpu.vector_store %arg9[%c0_30, %c0_31, %c0_32], %68 {strides = array<i32>} : memref<1x8x128xf32, #tpu.memory_space<vmem>>, vector<1x8x128xf32>,
    return
  }
  func.func @transform_0(%arg0: i32, %arg1: i32, %arg2: memref<16xi32, #tpu.memory_space<smem>>) -> (i32, i32, i32) {
    %c0_i32 = arith.constant 0 : i32
    %c0_i32_0 = arith.constant 0 : i32
    return %arg1, %arg0, %c0_i32 : i32, i32, i32
  }
  func.func @transform_1(%arg0: i32, %arg1: i32, %arg2: memref<16xi32, #tpu.memory_space<smem>>) -> (i32, i32) {
    %c0_i32 = arith.constant 0 : i32
    %c0_i32_0 = arith.constant 0 : i32
    return %arg0, %c0_i32 : i32, i32
  }
  func.func @transform_2(%arg0: i32, %arg1: i32, %arg2: memref<16xi32, #tpu.memory_space<smem>>) -> (i32, i32) {
    %c0_i32 = arith.constant 0 : i32
    %c0_i32_0 = arith.constant 0 : i32
    %c0_i32_1 = arith.constant 0 : i32
    return %c0_i32, %c0_i32_0 : i32, i32
  }
  func.func @transform_3(%arg0: i32, %arg1: i32, %arg2: memref<16xi32, #tpu.memory_space<smem>>) -> (i32, i32) {
    %c0_i32 = arith.constant 0 : i32
    %c0_i32_0 = arith.constant 0 : i32
    %c0_i32_1 = arith.constant 0 : i32
    return %c0_i32, %c0_i32_0 : i32, i32
  }
  func.func @transform_4(%arg0: i32, %arg1: i32, %arg2: memref<16xi32, #tpu.memory_space<smem>>) -> (i32, i32) {
    %c0_i32 = arith.constant 0 : i32
    %c0_i32_0 = arith.constant 0 : i32
    %c0_i32_1 = arith.constant 0 : i32
    return %c0_i32, %c0_i32_0 : i32, i32
  }
  func.func @transform_6(%arg0: i32, %arg1: i32, %arg2: memref<16xi32, #tpu.memory_space<smem>>) -> (i32, i32, i32) {
    %c0_i32 = arith.constant 0 : i32
    %c0_i32_0 = arith.constant 0 : i32
    return %arg1, %arg0, %c0_i32 : i32, i32, i32
  }
}

</mosaic_0001>

<llo_original>
// kernel: tpu_custom_call.1
$region0: #{tpu_custom_call.1}
  #allocation0 [shape = 'u32[]', space=smem, size = 0x4, offset = 0x4, fixed_abs, tag = 'smem constant byte address 0x4 - core index']
  #allocation1 [shape = 'u32[144,128]{1,0:T(1,128)}', space=vmem, size = 0x12000, scoped, tag = 'internal scratch']
  #allocation2 [shape = 'f32[2,8,128]{2,1,0:T(8,128)}', space=vmem, size = 0x2000, scoped, tag = 'scratch operand']
  #allocation3 [shape = 's32[2]{0}', space=sflag, size = 0x8, scoped, tag = 'scratch operand']
  #allocation4 [shape = 's32[1]{0}', space=sflag, size = 0x4, scoped, tag = 'scoped memory for tpu_custom_call.1']
  #allocation5 [shape = 'u8[512]{0}', space=smem, size = 0x200, scoped, tag = 'prefetched SMEM operand 0']
  #allocation8 [shape = 's32[]', space=sflag, size = 0x4, offset = 0, fixed_abs, tag = 'sflag constant byte address 0x0 - dummy sync flag']
  #allocation9 [shape = 's32[]', space=sflag, size = 0x4, offset = 0, fixed_abs, tag = 'sflag constant byte address 0x0 - dummy sync flag']
  #allocation10 [shape = 'u32[]', space=smem, size = 0x4, offset = 0x44, fixed_abs, tag = 'smem constant byte address 0x44 - assertion arg 0']
  #allocation11 [shape = 'u32[]', space=smem, size = 0x4, offset = 0x48, fixed_abs, tag = 'smem constant byte address 0x48 - assertion arg 1']
  #allocation12 [shape = 's32[]', space=sflag, size = 0x4, offset = 0, fixed_abs, tag = 'sflag constant byte address 0x0 - dummy sync flag']
  #allocation13 [shape = 's32[]', space=sflag, size = 0x4, offset = 0, fixed_abs, tag = 'sflag constant byte address 0x0 - dummy sync flag']
  #allocation14 [shape = 's32[]', space=sflag, size = 0x4, offset = 0, fixed_abs, tag = 'sflag constant byte address 0x0 - dummy sync flag']
  #allocation15 [shape = 's32[]', space=sflag, size = 0x4, offset = 0, fixed_abs, tag = 'sflag constant byte address 0x0 - dummy sync flag']
  #allocation16 [shape = 's32[]', space=sflag, size = 0x4, offset = 0, fixed_abs, tag = 'sflag constant byte address 0x0 - dummy sync flag']
  #allocation17 [shape = 's32[]', space=sflag, size = 0x4, offset = 0, fixed_abs, tag = 'sflag constant byte address 0x0 - dummy sync flag']
  #allocation18 [shape = 's32[]', space=sflag, size = 0x4, offset = 0, fixed_abs, tag = 'sflag constant byte address 0x0 - dummy sync flag']
  #allocation19 [shape = 's32[]', space=sflag, size = 0x4, offset = 0, fixed_abs, tag = 'sflag constant byte address 0x0 - dummy sync flag']
  #allocation20 [shape = 's32[]', space=sflag, size = 0x4, offset = 0, fixed_abs, tag = 'sflag constant byte address 0x0 - dummy sync flag']
  #allocation21 [shape = 's32[]', space=sflag, size = 0x4, offset = 0, fixed_abs, tag = 'sflag constant byte address 0x0 - dummy sync flag']
  #allocation22 [shape = 's32[]', space=sflag, size = 0x4, offset = 0, fixed_abs, tag = 'sflag constant byte address 0x0 - dummy sync flag']
  #allocation23 [shape = 's32[]', space=sflag, size = 0x4, offset = 0, fixed_abs, tag = 'sflag constant byte address 0x0 - dummy sync flag']
  #allocation24 [shape = 's32[]', space=sflag, size = 0x4, offset = 0, fixed_abs, tag = 'sflag constant byte address 0x0 - dummy sync flag']
  #allocation25 [shape = 's32[]', space=sflag, size = 0x4, offset = 0, fixed_abs, tag = 'sflag constant byte address 0x0 - dummy sync flag']
  #allocation26 [shape = 's32[]', space=sflag, size = 0x4, offset = 0, fixed_abs, tag = 'sflag constant byte address 0x0 - dummy sync flag']
  #allocation27 [shape = 's32[]', space=sflag, size = 0x4, offset = 0, fixed_abs, tag = 'sflag constant byte address 0x0 - dummy sync flag']
  #allocation28 [shape = 's32[]', space=sflag, size = 0x4, offset = 0, fixed_abs, tag = 'sflag constant byte address 0x0 - dummy sync flag']
  #allocation29 [shape = 's32[]', space=sflag, size = 0x4, offset = 0, fixed_abs, tag = 'sflag constant byte address 0x0 - dummy sync flag']
  #allocation30 [shape = 's32[]', space=sflag, size = 0x4, offset = 0, fixed_abs, tag = 'sflag constant byte address 0x0 - dummy sync flag']
  #allocation31 [shape = 's32[]', space=sflag, size = 0x4, offset = 0, fixed_abs, tag = 'sflag constant byte address 0x0 - dummy sync flag']
  #allocation32 [shape = 's32[]', space=sflag, size = 0x4, offset = 0, fixed_abs, tag = 'sflag constant byte address 0x0 - dummy sync flag']
  #allocation33 [shape = 's32[]', space=sflag, size = 0x4, offset = 0, fixed_abs, tag = 'sflag constant byte address 0x0 - dummy sync flag']
  #allocation34 [shape = 's32[]', space=sflag, size = 0x4, offset = 0, fixed_abs, tag = 'sflag constant byte address 0x0 - dummy sync flag']
  #allocation35 [shape = 's32[]', space=sflag, size = 0x4, offset = 0, fixed_abs, tag = 'sflag constant byte address 0x0 - dummy sync flag']
  #allocation36 [shape = 's32[]', space=sflag, size = 0x4, offset = 0, fixed_abs, tag = 'sflag constant byte address 0x0 - dummy sync flag']
  #allocation37 [shape = 's32[]', space=sflag, size = 0x4, offset = 0, fixed_abs, tag = 'sflag constant byte address 0x0 - dummy sync flag']
  #allocation38 [shape = 's32[]', space=sflag, size = 0x4, offset = 0, fixed_abs, tag = 'sflag constant byte address 0x0 - dummy sync flag']
  #allocation39 [shape = 's32[]', space=sflag, size = 0x4, offset = 0, fixed_abs, tag = 'sflag constant byte address 0x0 - dummy sync flag']
  #allocation40 [shape = 's32[]', space=sflag, size = 0x4, offset = 0, fixed_abs, tag = 'sflag constant byte address 0x0 - dummy sync flag']
  #allocation41 [shape = 's32[]', space=sflag, size = 0x4, offset = 0, fixed_abs, tag = 'sflag constant byte address 0x0 - dummy sync flag']
  %s0 = inlined_call_operand.vmem [shape: s32[16], index: 0, kind: input, shape index: {}]
  %s1 = inlined_call_operand.vmem [shape: f32[2,8,1], index: 1, kind: input, shape index: {}]
  %s2 = inlined_call_operand.vmem [shape: f32[8,128], index: 2, kind: input, shape index: {}]
  %s3 = inlined_call_operand.vmem [shape: f32[2,128], index: 3, kind: input, shape index: {}]
  %s4 = inlined_call_operand.vmem [shape: f32[1,128], index: 4, kind: input, shape index: {}]
  %s5 = inlined_call_operand.vmem [shape: f32[1,128], index: 5, kind: input, shape index: {}]
  %s6 = inlined_call_operand.hbm [shape: f32[64,128], index: 6, kind: input, shape index: {}]
  %s7 = inlined_call_operand.hbm [shape: f32[2,8,128], index: 7, kind: output, shape index: {}]
  %s8 = sld [smem:[#allocation0]]
  $region125: #{tpu_custom_call.1} parent=0
    _
  %s10 = ssub.s32 1, %s8
  %s11 = scalar_select 0, %s10, %s8
  %s12 = sshll.u32 %s0, 4
  %s13 = int_to_ptr.vmem [resolvable:$true] %s12
  %15 = dma.vmem_to_smem %s13, 16, [#allocation5], [#allocation4]
  %16 = dma.done [#allocation4], 16
  %17 = sfence
  $region1: #{tpu_custom_call.1} parent=0
    #allocation6 [shape = 'u8[8192]{0}', space=vmem, size = 0x2000, scoped, tag = 'output window, operand 0']
    #allocation7 [shape = 's32[2]{0}', space=sflag, size = 0x8, scoped, tag = 'scoped memory for tpu_custom_call.1']
    %18 = vsyncpa [#allocation7], 0
    %s19 = scalar_lea.sflag [#allocation7], 1
    %20 = vsyncpa %s19, 0
    loop: start=0, step=1, limit=4
    $region2: #{tpu_custom_call.1} parent=1 // loop_pre_header
      _
    $region3: #{tpu_custom_call.1} parent=1 // loop_header
      %s22 = sphi 0, %s26
      %p23 = scmp.ge.s32.totalorder %s22, 4
      %s29 = sphi 0, %s41
      %s30 = sphi 0, %s37
      %s31 = sphi 0, %s29
      %s32 = sphi 0, %s30
      %s33 = sphi 0, %s31
      %s34 = sphi 0, %s32
      %s46 = sphi 0, %s48
      %s49 = sphi 0, %s46
      %s50 = sphi 0, %s49
      %s66 = sphi 0, %s50
      %s72 = sphi 0, %s74
      %s75 = sphi 0, %s72
      %s76 = sphi 0, %s75
      %s92 = sphi 0, %s76
      %s96 = sphi 0, %s96
      %s98 = sphi 0, %s96
      %s99 = sphi 0, %s98
      %s113 = sphi 0, %s99
      %s117 = sphi 0, %s117
      %s119 = sphi 0, %s117
      %s120 = sphi 0, %s119
      %s134 = sphi 0, %s120
      %s138 = sphi 0, %s138
      %s140 = sphi 0, %s138
      %s141 = sphi 0, %s140
      %s155 = sphi 0, %s141
      %s163 = sphi 0, %s165
      %s166 = sphi 0, %s163
      %s167 = sphi 0, %s166
      %s183 = sphi 0, %s167
    $region4: #{tpu_custom_call.1} parent=1 // loop_header_branch
      %25 = sbr.rel (%p23) target = $region8
    $region5: #{tpu_custom_call.1} parent=1 // loop_body
      %s27 = ssub.s32 %s22, 1
      %s28 = ssub.s32 %s22, 2
      %s35 = sadd.s32 1, %s30
      %p36 = scmp.ge.s32.totalorder %s35, 2
      %s37 = scalar_select %p36, 0, %s35
      %s38 = sadd.s32 1, %s29
      %s39 = scalar_select %p36, %s38, %s29
      %p40 = scmp.ge.s32.totalorder %s39, 1
      %s41 = scalar_select %p40, 0, %s39
      %s42 = ssub.s32 %s30, %s37
      %s43 = ssub.s32 %s29, %s41
      %s44 = sor.u32 %s42, %s43
      %p45 = scmp.eq.s32.totalorder %s44, 0
      %s47 = sadd.s32 %s46, 1
      %s48 = scalar_select %p45, %s46, %s47
      %p51 = pneg %p45
      %p52 = scmp.eq.s32.totalorder %s22, 1
      %p53 = por %p51, %p52
      %p54 = scmp.ne.s32.totalorder %s46, %s49
      %p55 = scmp.eq.s32.totalorder %s22, 0
      %p56 = por %p54, %p55
      %p57 = scmp.ne.s32.totalorder %s46, %s49
      %p58 = scmp.eq.s32.totalorder %s27, 1
      %p59 = por %p57, %p58
      %p60 = scmp.ne.s32.totalorder %s49, %s50
      %p61 = scmp.eq.s32.totalorder %s27, 0
      %p62 = por %p60, %p61
      %p63 = scmp.ne.s32.totalorder %s49, %s50
      %p64 = scmp.eq.s32.totalorder %s28, 1
      %p65 = por %p63, %p64
      %p67 = scmp.ne.s32.totalorder %s50, %s66
      %p68 = scmp.eq.s32.totalorder %s28, 0
      %p69 = por %p67, %p68
      %s70 = ssub.s32 %s29, %s41
      %p71 = scmp.eq.s32.totalorder %s70, 0
      %s73 = sadd.s32 %s72, 1
      %s74 = scalar_select %p71, %s72, %s73
      %p77 = pneg %p71
      %p78 = scmp.eq.s32.totalorder %s22, 1
      %p79 = por %p77, %p78
      %p80 = scmp.ne.s32.totalorder %s72, %s75
      %p81 = scmp.eq.s32.totalorder %s22, 0
      %p82 = por %p80, %p81
      %p83 = scmp.ne.s32.totalorder %s72, %s75
      %p84 = scmp.eq.s32.totalorder %s27, 1
      %p85 = por %p83, %p84
      %p86 = scmp.ne.s32.totalorder %s75, %s76
      %p87 = scmp.eq.s32.totalorder %s27, 0
      %p88 = por %p86, %p87
      %p89 = scmp.ne.s32.totalorder %s75, %s76
      %p90 = scmp.eq.s32.totalorder %s28, 1
      %p91 = por %p89, %p90
      %p93 = scmp.ne.s32.totalorder %s76, %s92
      %p94 = scmp.eq.s32.totalorder %s28, 0
      %p95 = por %p93, %p94
      %s97 = sadd.s32 %s96, 1
      %p100 = scmp.eq.s32.totalorder %s22, 1
      %p101 = scmp.ne.s32.totalorder %s96, %s98
      %p102 = scmp.eq.s32.totalorder %s22, 0
      %p103 = por %p101, %p102
      %p104 = scmp.ne.s32.totalorder %s96, %s98
      %p105 = scmp.eq.s32.totalorder %s27, 1
      %p106 = por %p104, %p105
      %p107 = scmp.ne.s32.totalorder %s98, %s99
      %p108 = scmp.eq.s32.totalorder %s27, 0
      %p109 = por %p107, %p108
      %p110 = scmp.ne.s32.totalorder %s98, %s99
      %p111 = scmp.eq.s32.totalorder %s28, 1
      %p112 = por %p110, %p111
      %p114 = scmp.ne.s32.totalorder %s99, %s113
      %p115 = scmp.eq.s32.totalorder %s28, 0
      %p116 = por %p114, %p115
      %s118 = sadd.s32 %s117, 1
      %p121 = scmp.eq.s32.totalorder %s22, 1
      %p122 = scmp.ne.s32.totalorder %s117, %s119
      %p123 = scmp.eq.s32.totalorder %s22, 0
      %p124 = por %p122, %p123
      %p125 = scmp.ne.s32.totalorder %s117, %s119
      %p126 = scmp.eq.s32.totalorder %s27, 1
      %p127 = por %p125, %p126
      %p128 = scmp.ne.s32.totalorder %s119, %s120
      %p129 = scmp.eq.s32.totalorder %s27, 0
      %p130 = por %p128, %p129
      %p131 = scmp.ne.s32.totalorder %s119, %s120
      %p132 = scmp.eq.s32.totalorder %s28, 1
      %p133 = por %p131, %p132
      %p135 = scmp.ne.s32.totalorder %s120, %s134
      %p136 = scmp.eq.s32.totalorder %s28, 0
      %p137 = por %p135, %p136
      %s139 = sadd.s32 %s138, 1
      %p142 = scmp.eq.s32.totalorder %s22, 1
      %p143 = scmp.ne.s32.totalorder %s138, %s140
      %p144 = scmp.eq.s32.totalorder %s22, 0
      %p145 = por %p143, %p144
      %p146 = scmp.ne.s32.totalorder %s138, %s140
      %p147 = scmp.eq.s32.totalorder %s27, 1
      %p148 = por %p146, %p147
      %p149 = scmp.ne.s32.totalorder %s140, %s141
      %p150 = scmp.eq.s32.totalorder %s27, 0
      %p151 = por %p149, %p150
      %p152 = scmp.ne.s32.totalorder %s140, %s141
      %p153 = scmp.eq.s32.totalorder %s28, 1
      %p154 = por %p152, %p153
      %p156 = scmp.ne.s32.totalorder %s141, %s155
      %p157 = scmp.eq.s32.totalorder %s28, 0
      %p158 = por %p156, %p157
      %s159 = ssub.s32 %s30, %s37
      %s160 = ssub.s32 %s29, %s41
      %s161 = sor.u32 %s159, %s160
      %p162 = scmp.eq.s32.totalorder %s161, 0
      %s164 = sadd.s32 %s163, 1
      %s165 = scalar_select %p162, %s163, %s164
      %p168 = pneg %p162
      %p169 = scmp.eq.s32.totalorder %s22, 1
      %p170 = por %p168, %p169
      %p171 = scmp.ne.s32.totalorder %s163, %s166
      %p172 = scmp.eq.s32.totalorder %s22, 0
      %p173 = por %p171, %p172
      %p174 = scmp.ne.s32.totalorder %s163, %s166
      %p175 = scmp.eq.s32.totalorder %s27, 1
      %p176 = por %p174, %p175
      %p177 = scmp.ne.s32.totalorder %s166, %s167
      %p178 = scmp.eq.s32.totalorder %s27, 0
      %p179 = por %p177, %p178
      %p180 = scmp.ne.s32.totalorder %s166, %s167
      %p181 = scmp.eq.s32.totalorder %s28, 1
      %p182 = por %p180, %p181
      %p184 = scmp.ne.s32.totalorder %s167, %s183
      %p185 = scmp.eq.s32.totalorder %s28, 0
      %p186 = por %p184, %p185
      %p187 = scmp.le.s32.totalorder 1, %s22
      %p188 = scmp.lt.s32.totalorder %s22, 3
      %p189 = pnand %p187, %p188
      %p190 = pneg %p189
      // Predicated region
      $region9: #{tpu_custom_call.1} parent=5 // pred_check
        _
      $region10: #{tpu_custom_call.1} parent=5 // pred_check_branch
        %192 = sbr.rel (%p189) target = $region12
      $region11: #{tpu_custom_call.1} parent=5 // pred_region
        %s193 = ssub.s32 %s22, 1
        // Predicated region
        $region13: #{tpu_custom_call.1} parent=11 // pred_check
          %p194 = pneg %p88
        $region14: #{tpu_custom_call.1} parent=11 // pred_check_branch
          %196 = sbr.rel (%p194) target = $region16
        $region15: #{tpu_custom_call.1} parent=11 // pred_region
          %p197 = scmp.lt.s32.totalorder %s31, 0
          %s198 = scalar_select %p197, %s31, 0
          %s199 = smul.addr %s198, 8
          %s200 = scalar_lea.vmem %s2, %s199
        $region16: #{tpu_custom_call.1} parent=11 // pred_fallthru
          _
        // Predicated region
        $region17: #{tpu_custom_call.1} parent=11 // pred_check
          %p201 = pneg %p109
        $region18: #{tpu_custom_call.1} parent=11 // pred_check_branch
          %203 = sbr.rel (%p201) target = $region20
        $region19: #{tpu_custom_call.1} parent=11 // pred_region
          _
        $region20: #{tpu_custom_call.1} parent=11 // pred_fallthru
          _
        // Predicated region
        $region21: #{tpu_custom_call.1} parent=11 // pred_check
          %p204 = pneg %p130
        $region22: #{tpu_custom_call.1} parent=11 // pred_check_branch
          %206 = sbr.rel (%p204) target = $region24
        $region23: #{tpu_custom_call.1} parent=11 // pred_region
          _
        $region24: #{tpu_custom_call.1} parent=11 // pred_fallthru
          _
        // Predicated region
        $region25: #{tpu_custom_call.1} parent=11 // pred_check
          %p207 = pneg %p151
        $region26: #{tpu_custom_call.1} parent=11 // pred_check_branch
          %209 = sbr.rel (%p207) target = $region28
        $region27: #{tpu_custom_call.1} parent=11 // pred_region
          _
        $region28: #{tpu_custom_call.1} parent=11 // pred_fallthru
          _
      $region12: #{tpu_custom_call.1} parent=5 // pred_fallthru
        _
      %p210 = scmp.lt.s32.totalorder %s22, 2
      // Predicated region
      $region29: #{tpu_custom_call.1} parent=5 // pred_check
        %p211 = pneg %p210
      $region30: #{tpu_custom_call.1} parent=5 // pred_check_branch
        %213 = sbr.rel (%p211) target = $region32
      $region31: #{tpu_custom_call.1} parent=5 // pred_region
        // Predicated region
        $region33: #{tpu_custom_call.1} parent=31 // pred_check
          %p214 = pneg %p56
        $region34: #{tpu_custom_call.1} parent=31 // pred_check_branch
          %216 = sbr.rel (%p214) target = $region36
        $region35: #{tpu_custom_call.1} parent=31 // pred_region
          %p217 = scmp.lt.s32.totalorder %s30, 1
          %s218 = scalar_select %p217, %s30, 1
          %p219 = scmp.lt.s32.totalorder %s29, 0
          %s220 = scalar_select %p219, %s29, 0
          %s221 = sadd.s32 %s220, %s218
          %s222 = smul.addr %s221, 8
          %s223 = scalar_lea.vmem %s1, %s222
        $region36: #{tpu_custom_call.1} parent=31 // pred_fallthru
          _
      $region32: #{tpu_custom_call.1} parent=5 // pred_fallthru
        _
      %p224 = scmp.le.s32.totalorder 1, %s22
      %p225 = scmp.lt.s32.totalorder %s22, 3
      %p226 = pnand %p224, %p225
      %p227 = pneg %p226
      // Predicated region
      $region37: #{tpu_custom_call.1} parent=5 // pred_check
        _
      $region38: #{tpu_custom_call.1} parent=5 // pred_check_branch
        %229 = sbr.rel (%p226) target = $region40
      $region39: #{tpu_custom_call.1} parent=5 // pred_region
        %s230 = ssub.s32 %s22, 1
        %p231 = scmp.lt.s32.totalorder %s32, 1
        %s232 = scalar_select %p231, %s32, 1
        %p233 = scmp.lt.s32.totalorder %s31, 0
        %s234 = scalar_select %p233, %s31, 0
        %s235 = sadd.s32 %s234, %s232
        %s236 = smul.addr %s235, 8
        %s237 = scalar_lea.vmem %s1, %s236
        %p238 = pneg %p62
        %p239 = pneg %p59
        %p240 = scmp.lt.s32.totalorder %s31, 0
        %s241 = scalar_select %p240, %s31, 0
        %s242 = smul.addr %s241, 8
        %s243 = scalar_lea.vmem %s2, %s242
        %p244 = pneg %p88
        %p245 = pneg %p85
        %p246 = pneg %p109
        %p247 = pneg %p106
        %p248 = pneg %p130
        %p249 = pneg %p127
        %p250 = pneg %p151
        %p251 = pneg %p148
        %p252 = pneg %p179
        %p253 = pneg %p176
        %s254 = sand.u32 %s166, 1
        %s255 = scalar_lea.sflag [#allocation7], %s254
        %s256 = sand.u32 %s166, 1
        %s257 = smul.addr %s256, 8
        %s258 = scalar_lea.vmem [#allocation6], %s257
        %p259 = scmp.lt.s32.totalorder %s32, 1
        %s260 = scalar_select %p259, %s32, 1
        %p261 = scmp.lt.s32.totalorder %s31, 0
        %s262 = scalar_select %p261, %s31, 0
        %s263 = sadd.s32 %s262, %s260
        %s264 = smul.addr %s263, 8
        %s265 = scalar_lea.vmem %s1, %s264
        %p266 = scmp.lt.s32.totalorder %s31, 0
        %s267 = scalar_select %p266, %s31, 0
        %s268 = smul.addr %s267, 8
        %s269 = scalar_lea.vmem %s2, %s268
        %p270 = scmp.lt.s32.totalorder %s32, 0
        %s271 = ssub.s32 0, %s32
        %s272 = scalar_select %p270, %s271, %s32
        %s273 = sand.u32 %s272, 1
        %s274 = ssub.s32 0, %s273
        %s275 = scalar_select %p270, %s274, %s273
        %p276 = scmp.ne.s32.totalorder %s275, 0
        %p277 = scmp.lt.s32.totalorder %s275, 0
        %p278 = pnand %p277, %p276
        %p279 = pneg %p278
        %s280 = sadd.s32 %s275, 2
        %s281 = scalar_select %p279, %s280, %s275
        %p282 = scmp.eq.s32.totalorder %s32, 0
        // Predicated region
        $region41: #{tpu_custom_call.1} parent=39 // pred_check
          %p283 = pneg %p282
        $region42: #{tpu_custom_call.1} parent=39 // pred_check_branch
          %285 = sbr.rel (%p283) target = $region44
        $region43: #{tpu_custom_call.1} parent=39 // pred_region
          %s286 = smul.u32 %s31, 8
          %s287 = sld [smem:[#allocation5 + %s286]]
          %s288 = smul.addr %s287, 16
          %s289 = scalar_lea.hbm %s6, %s288
          // Predicated region
          $region45: #{tpu_custom_call.1} parent=43 // pred_check
            _
          $region46: #{tpu_custom_call.1} parent=43 // pred_check_branch
            %291 = sbr.rel target = $region48
          $region47: #{tpu_custom_call.1} parent=43 // pred_region
            %292 = sst [smem:[#allocation10]] [#allocation9]
            %293 = sst [smem:[#allocation11]] [#allocation8]
          $region48: #{tpu_custom_call.1} parent=43 // pred_fallthru
            _
          %295 = shalt.err (0)
          %s297 = sshll.u32 [#allocation2], 4
          %s298 = int_to_ptr.vmem [resolvable:$true] %s297
          %300 = dma.hbm_to_vmem [thread:$0]  %s289, 16, %s298, [#allocation3]
          %s301 = sadd.s32 %s286, 1
          %s302 = sld [smem:[#allocation5 + %s301]]
          %s303 = smul.addr %s302, 16
          %s304 = scalar_lea.hbm %s6, %s303
          %s305 = scalar_lea.vmem [#allocation2], 1
          // Predicated region
          $region49: #{tpu_custom_call.1} parent=43 // pred_check
            _
          $region50: #{tpu_custom_call.1} parent=43 // pred_check_branch
            %307 = sbr.rel target = $region52
          $region51: #{tpu_custom_call.1} parent=43 // pred_region
            %308 = sst [smem:[#allocation10]] [#allocation13]
            %309 = sst [smem:[#allocation11]] [#allocation12]
          $region52: #{tpu_custom_call.1} parent=43 // pred_fallthru
            _
          %311 = shalt.err (0)
          %s313 = sshll.u32 %s305, 4
          %s314 = int_to_ptr.vmem [resolvable:$true] %s313
          %316 = dma.hbm_to_vmem [thread:$0]  %s304, 16, %s314, [#allocation3]
          %s317 = sadd.s32 %s286, 2
          %s318 = sld [smem:[#allocation5 + %s317]]
          %s319 = smul.addr %s318, 16
          %s320 = scalar_lea.hbm %s6, %s319
          %s321 = scalar_lea.vmem [#allocation2], 2
          // Predicated region
          $region53: #{tpu_custom_call.1} parent=43 // pred_check
            _
          $region54: #{tpu_custom_call.1} parent=43 // pred_check_branch
            %323 = sbr.rel target = $region56
          $region55: #{tpu_custom_call.1} parent=43 // pred_region
            %324 = sst [smem:[#allocation10]] [#allocation15]
            %325 = sst [smem:[#allocation11]] [#allocation14]
          $region56: #{tpu_custom_call.1} parent=43 // pred_fallthru
            _
          %327 = shalt.err (0)
          %s329 = sshll.u32 %s321, 4
          %s330 = int_to_ptr.vmem [resolvable:$true] %s329
          %332 = dma.hbm_to_vmem [thread:$0]  %s320, 16, %s330, [#allocation3]
          %s333 = sadd.s32 %s286, 3
          %s334 = sld [smem:[#allocation5 + %s333]]
          %s335 = smul.addr %s334, 16
          %s336 = scalar_lea.hbm %s6, %s335
          %s337 = scalar_lea.vmem [#allocation2], 3
          // Predicated region
          $region57: #{tpu_custom_call.1} parent=43 // pred_check
            _
          $region58: #{tpu_custom_call.1} parent=43 // pred_check_branch
            %339 = sbr.rel target = $region60
          $region59: #{tpu_custom_call.1} parent=43 // pred_region
            %340 = sst [smem:[#allocation10]] [#allocation17]
            %341 = sst [smem:[#allocation11]] [#allocation16]
          $region60: #{tpu_custom_call.1} parent=43 // pred_fallthru
            _
          %343 = shalt.err (0)
          %s345 = sshll.u32 %s337, 4
          %s346 = int_to_ptr.vmem [resolvable:$true] %s345
          %348 = dma.hbm_to_vmem [thread:$0]  %s336, 16, %s346, [#allocation3]
          %s349 = sadd.s32 %s286, 4
          %s350 = sld [smem:[#allocation5 + %s349]]
          %s351 = smul.addr %s350, 16
          %s352 = scalar_lea.hbm %s6, %s351
          %s353 = scalar_lea.vmem [#allocation2], 4
          // Predicated region
          $region61: #{tpu_custom_call.1} parent=43 // pred_check
            _
          $region62: #{tpu_custom_call.1} parent=43 // pred_check_branch
            %355 = sbr.rel target = $region64
          $region63: #{tpu_custom_call.1} parent=43 // pred_region
            %356 = sst [smem:[#allocation10]] [#allocation19]
            %357 = sst [smem:[#allocation11]] [#allocation18]
          $region64: #{tpu_custom_call.1} parent=43 // pred_fallthru
            _
          %359 = shalt.err (0)
          %s361 = sshll.u32 %s353, 4
          %s362 = int_to_ptr.vmem [resolvable:$true] %s361
          %364 = dma.hbm_to_vmem [thread:$0]  %s352, 16, %s362, [#allocation3]
          %s365 = sadd.s32 %s286, 5
          %s366 = sld [smem:[#allocation5 + %s365]]
          %s367 = smul.addr %s366, 16
          %s368 = scalar_lea.hbm %s6, %s367
          %s369 = scalar_lea.vmem [#allocation2], 5
          // Predicated region
          $region65: #{tpu_custom_call.1} parent=43 // pred_check
            _
          $region66: #{tpu_custom_call.1} parent=43 // pred_check_branch
            %371 = sbr.rel target = $region68
          $region67: #{tpu_custom_call.1} parent=43 // pred_region
            %372 = sst [smem:[#allocation10]] [#allocation21]
            %373 = sst [smem:[#allocation11]] [#allocation20]
          $region68: #{tpu_custom_call.1} parent=43 // pred_fallthru
            _
          %375 = shalt.err (0)
          %s377 = sshll.u32 %s369, 4
          %s378 = int_to_ptr.vmem [resolvable:$true] %s377
          %380 = dma.hbm_to_vmem [thread:$0]  %s368, 16, %s378, [#allocation3]
          %s381 = sadd.s32 %s286, 6
          %s382 = sld [smem:[#allocation5 + %s381]]
          %s383 = smul.addr %s382, 16
          %s384 = scalar_lea.hbm %s6, %s383
          %s385 = scalar_lea.vmem [#allocation2], 6
          // Predicated region
          $region69: #{tpu_custom_call.1} parent=43 // pred_check
            _
          $region70: #{tpu_custom_call.1} parent=43 // pred_check_branch
            %387 = sbr.rel target = $region72
          $region71: #{tpu_custom_call.1} parent=43 // pred_region
            %388 = sst [smem:[#allocation10]] [#allocation23]
            %389 = sst [smem:[#allocation11]] [#allocation22]
          $region72: #{tpu_custom_call.1} parent=43 // pred_fallthru
            _
          %391 = shalt.err (0)
          %s393 = sshll.u32 %s385, 4
          %s394 = int_to_ptr.vmem [resolvable:$true] %s393
          %396 = dma.hbm_to_vmem [thread:$0]  %s384, 16, %s394, [#allocation3]
          %s397 = sadd.s32 %s286, 7
          %s398 = sld [smem:[#allocation5 + %s397]]
          %s399 = smul.addr %s398, 16
          %s400 = scalar_lea.hbm %s6, %s399
          %s401 = scalar_lea.vmem [#allocation2], 7
          // Predicated region
          $region73: #{tpu_custom_call.1} parent=43 // pred_check
            _
          $region74: #{tpu_custom_call.1} parent=43 // pred_check_branch
            %403 = sbr.rel target = $region76
          $region75: #{tpu_custom_call.1} parent=43 // pred_region
            %404 = sst [smem:[#allocation10]] [#allocation25]
            %405 = sst [smem:[#allocation11]] [#allocation24]
          $region76: #{tpu_custom_call.1} parent=43 // pred_fallthru
            _
          %407 = shalt.err (0)
          %s409 = sshll.u32 %s401, 4
          %s410 = int_to_ptr.vmem [resolvable:$true] %s409
          %412 = dma.hbm_to_vmem [thread:$0]  %s400, 16, %s410, [#allocation3]
        $region44: #{tpu_custom_call.1} parent=39 // pred_fallthru
          _
        %s413 = sadd.s32 %s32, 1
        %p414 = scmp.lt.s32.totalorder %s413, 2
        // Predicated region
        $region77: #{tpu_custom_call.1} parent=39 // pred_check
          %p415 = pneg %p414
        $region78: #{tpu_custom_call.1} parent=39 // pred_check_branch
          %417 = sbr.rel (%p415) target = $region80
        $region79: #{tpu_custom_call.1} parent=39 // pred_region
          %p418 = scmp.lt.s32.totalorder %s413, 0
          %s419 = ssub.s32 0, %s413
          %s420 = scalar_select %p418, %s419, %s413
          %s421 = sand.u32 %s420, 1
          %s422 = ssub.s32 0, %s421
          %s423 = scalar_select %p418, %s422, %s421
          %p424 = scmp.ne.s32.totalorder %s423, 0
          %p425 = scmp.lt.s32.totalorder %s423, 0
          %p426 = pnand %p425, %p424
          %p427 = pneg %p426
          %s428 = sadd.s32 %s423, 2
          %s429 = scalar_select %p427, %s428, %s423
          %s430 = smul.u32 %s413, 8
          %s431 = smul.u32 %s31, 8
          %s432 = sadd.s32 %s430, %s431
          %s433 = sld [smem:[#allocation5 + %s432]]
          %s434 = smul.addr %s433, 16
          %s435 = scalar_lea.hbm %s6, %s434
          %s436 = smul.u32 %s429, 8
          %s437 = scalar_lea.vmem [#allocation2], %s436
          %s438 = scalar_lea.sflag [#allocation3], %s429
          // Predicated region
          $region81: #{tpu_custom_call.1} parent=79 // pred_check
            _
          $region82: #{tpu_custom_call.1} parent=79 // pred_check_branch
            %440 = sbr.rel target = $region84
          $region83: #{tpu_custom_call.1} parent=79 // pred_region
            %441 = sst [smem:[#allocation10]] [#allocation27]
            %442 = sst [smem:[#allocation11]] [#allocation26]
          $region84: #{tpu_custom_call.1} parent=79 // pred_fallthru
            _
          %444 = shalt.err (0)
          %s446 = sshll.u32 %s437, 4
          %s447 = int_to_ptr.vmem [resolvable:$true] %s446
          %449 = dma.hbm_to_vmem [thread:$0]  %s435, 16, %s447, %s438
          %s450 = sadd.s32 %s432, 1
          %s451 = sld [smem:[#allocation5 + %s450]]
          %s452 = smul.addr %s451, 16
          %s453 = scalar_lea.hbm %s6, %s452
          %s454 = scalar_lea.vmem %s437, 1 [#allocation2]
          // Predicated region
          $region85: #{tpu_custom_call.1} parent=79 // pred_check
            _
          $region86: #{tpu_custom_call.1} parent=79 // pred_check_branch
            %456 = sbr.rel target = $region88
          $region87: #{tpu_custom_call.1} parent=79 // pred_region
            %457 = sst [smem:[#allocation10]] [#allocation29]
            %458 = sst [smem:[#allocation11]] [#allocation28]
          $region88: #{tpu_custom_call.1} parent=79 // pred_fallthru
            _
          %460 = shalt.err (0)
          %s462 = sshll.u32 %s454, 4
          %s463 = int_to_ptr.vmem [resolvable:$true] %s462
          %465 = dma.hbm_to_vmem [thread:$0]  %s453, 16, %s463, %s438
          %s466 = sadd.s32 %s432, 2
          %s467 = sld [smem:[#allocation5 + %s466]]
          %s468 = smul.addr %s467, 16
          %s469 = scalar_lea.hbm %s6, %s468
          %s470 = scalar_lea.vmem %s437, 2 [#allocation2]
          // Predicated region
          $region89: #{tpu_custom_call.1} parent=79 // pred_check
            _
          $region90: #{tpu_custom_call.1} parent=79 // pred_check_branch
            %472 = sbr.rel target = $region92
          $region91: #{tpu_custom_call.1} parent=79 // pred_region
            %473 = sst [smem:[#allocation10]] [#allocation31]
            %474 = sst [smem:[#allocation11]] [#allocation30]
          $region92: #{tpu_custom_call.1} parent=79 // pred_fallthru
            _
          %476 = shalt.err (0)
          %s478 = sshll.u32 %s470, 4
          %s479 = int_to_ptr.vmem [resolvable:$true] %s478
          %481 = dma.hbm_to_vmem [thread:$0]  %s469, 16, %s479, %s438
          %s482 = sadd.s32 %s432, 3
          %s483 = sld [smem:[#allocation5 + %s482]]
          %s484 = smul.addr %s483, 16
          %s485 = scalar_lea.hbm %s6, %s484
          %s486 = scalar_lea.vmem %s437, 3 [#allocation2]
          // Predicated region
          $region93: #{tpu_custom_call.1} parent=79 // pred_check
            _
          $region94: #{tpu_custom_call.1} parent=79 // pred_check_branch
            %488 = sbr.rel target = $region96
          $region95: #{tpu_custom_call.1} parent=79 // pred_region
            %489 = sst [smem:[#allocation10]] [#allocation33]
            %490 = sst [smem:[#allocation11]] [#allocation32]
          $region96: #{tpu_custom_call.1} parent=79 // pred_fallthru
            _
          %492 = shalt.err (0)
          %s494 = sshll.u32 %s486, 4
          %s495 = int_to_ptr.vmem [resolvable:$true] %s494
          %497 = dma.hbm_to_vmem [thread:$0]  %s485, 16, %s495, %s438
          %s498 = sadd.s32 %s432, 4
          %s499 = sld [smem:[#allocation5 + %s498]]
          %s500 = smul.addr %s499, 16
          %s501 = scalar_lea.hbm %s6, %s500
          %s502 = scalar_lea.vmem %s437, 4 [#allocation2]
          // Predicated region
          $region97: #{tpu_custom_call.1} parent=79 // pred_check
            _
          $region98: #{tpu_custom_call.1} parent=79 // pred_check_branch
            %504 = sbr.rel target = $region100
          $region99: #{tpu_custom_call.1} parent=79 // pred_region
            %505 = sst [smem:[#allocation10]] [#allocation35]
            %506 = sst [smem:[#allocation11]] [#allocation34]
          $region100: #{tpu_custom_call.1} parent=79 // pred_fallthru
            _
          %508 = shalt.err (0)
          %s510 = sshll.u32 %s502, 4
          %s511 = int_to_ptr.vmem [resolvable:$true] %s510
          %513 = dma.hbm_to_vmem [thread:$0]  %s501, 16, %s511, %s438
          %s514 = sadd.s32 %s432, 5
          %s515 = sld [smem:[#allocation5 + %s514]]
          %s516 = smul.addr %s515, 16
          %s517 = scalar_lea.hbm %s6, %s516
          %s518 = scalar_lea.vmem %s437, 5 [#allocation2]
          // Predicated region
          $region101: #{tpu_custom_call.1} parent=79 // pred_check
            _
          $region102: #{tpu_custom_call.1} parent=79 // pred_check_branch
            %520 = sbr.rel target = $region104
          $region103: #{tpu_custom_call.1} parent=79 // pred_region
            %521 = sst [smem:[#allocation10]] [#allocation37]
            %522 = sst [smem:[#allocation11]] [#allocation36]
          $region104: #{tpu_custom_call.1} parent=79 // pred_fallthru
            _
          %524 = shalt.err (0)
          %s526 = sshll.u32 %s518, 4
          %s527 = int_to_ptr.vmem [resolvable:$true] %s526
          %529 = dma.hbm_to_vmem [thread:$0]  %s517, 16, %s527, %s438
          %s530 = sadd.s32 %s432, 6
          %s531 = sld [smem:[#allocation5 + %s530]]
          %s532 = smul.addr %s531, 16
          %s533 = scalar_lea.hbm %s6, %s532
          %s534 = scalar_lea.vmem %s437, 6 [#allocation2]
          // Predicated region
          $region105: #{tpu_custom_call.1} parent=79 // pred_check
            _
          $region106: #{tpu_custom_call.1} parent=79 // pred_check_branch
            %536 = sbr.rel target = $region108
          $region107: #{tpu_custom_call.1} parent=79 // pred_region
            %537 = sst [smem:[#allocation10]] [#allocation39]
            %538 = sst [smem:[#allocation11]] [#allocation38]
          $region108: #{tpu_custom_call.1} parent=79 // pred_fallthru
            _
          %540 = shalt.err (0)
          %s542 = sshll.u32 %s534, 4
          %s543 = int_to_ptr.vmem [resolvable:$true] %s542
          %545 = dma.hbm_to_vmem [thread:$0]  %s533, 16, %s543, %s438
          %s546 = sadd.s32 %s432, 7
          %s547 = sld [smem:[#allocation5 + %s546]]
          %s548 = smul.addr %s547, 16
          %s549 = scalar_lea.hbm %s6, %s548
          %s550 = scalar_lea.vmem %s437, 7 [#allocation2]
          // Predicated region
          $region109: #{tpu_custom_call.1} parent=79 // pred_check
            _
          $region110: #{tpu_custom_call.1} parent=79 // pred_check_branch
            %552 = sbr.rel target = $region112
          $region111: #{tpu_custom_call.1} parent=79 // pred_region
            %553 = sst [smem:[#allocation10]] [#allocation41]
            %554 = sst [smem:[#allocation11]] [#allocation40]
          $region112: #{tpu_custom_call.1} parent=79 // pred_fallthru
            _
          %556 = shalt.err (0)
          %s558 = sshll.u32 %s550, 4
          %s559 = int_to_ptr.vmem [resolvable:$true] %s558
          %561 = dma.hbm_to_vmem [thread:$0]  %s549, 16, %s559, %s438
        $region80: #{tpu_custom_call.1} parent=39 // pred_fallthru
          _
        %s562 = smul.u32 %s281, 8
        %s563 = scalar_lea.vmem [#allocation2], %s562
        %s564 = scalar_lea.sflag [#allocation3], %s281
        %s565 = smul.u32 8, 1
        %s566 = sshll.u32 %s565, 4
        %567 = dma.done %s564, %s566
        %v568 = vld [vmem:[%s265] sm:$0xff]
        %v569 = vld [vmem:[%s3] sm:$0x3]
        %vm570 = vcmp.eq.f32.partialorder %v568, 1.0
        %v571 = vsel %vm570, 1, 0
        %572 = vset.pattern.permute.xlu0 0
        %573 = vperm.xlu0 %572, %v571
        %v574 = vpop.permute.xlu0 %573
        %vm575 = vcmp.eq.s32.totalorder %v574, 1
        %v576 = vlaneseq
        %v577 = vshrl.u32 %v576, 7
        %v578 = vsub.s32 1, %v577
        %v579 = vrot.slane %v569, %v578
        %v580 = vlaneseq
        %v581 = vshrl.u32 %v580, 7
        %v582 = vsub.s32 0, %v581
        %v583 = vrot.slane %v569, %v582
        %v584 = vsel %vm575, %v579, %v583
        %v585 = vld [vmem:[%s563] sm:$0xff]
        %v586 = vld [vmem:[%s269] sm:$0xff]
        %v587 = vadd.f32 %v585, %v586
        %v588 = vadd.f32 %v587, %v584
        %589 = vadd.xlane.f32.xlu0 %v588
        %v590 = vpop.xlane.xlu0 %589
        %v591 = vmul.f32 %v588, %v588
        %592 = vadd.xlane.f32.xlu0 %v591
        %v593 = vpop.xlane.xlu0 %592
        %v594 = vmul.f32 %v590, 0.0078125
        %v595 = vmul.f32 %v593, 0.0078125
        %v596 = vmul.f32 %v594, %v594
        %v597 = vsub.f32 %v595, %v596
        %v598 = vmax.f32 %v597, 0.0
        %v599 = vadd.f32 %v598, 1e-12
        %v600 = vrsqrt.pop %v599
        %v601 = vsub.f32 %v588, %v594
        %v602 = vmul.f32 %v601, %v600
        %v603 = vld [vmem:[%s4] sm:$0x1]
        %v605 = vlaneseq
        %v606 = vshrl.u32 %v605, 7
        %v607 = vsub.s32 0, %v606
        %v608 = vrot.slane %v603, %v607
        %v610 = vmul.f32 %v602, %v608
        %v611 = vld [vmem:[%s5] sm:$0x1]
        %v613 = vlaneseq
        %v614 = vshrl.u32 %v613, 7
        %v615 = vsub.s32 0, %v614
        %v616 = vrot.slane %v611, %v615
        %v618 = vadd.f32 %v610, %v616
        %619 = vst [vmem:[%s258] sm:$0xff] %v618
        %s620 = sand.u32 %s166, 1
        %s621 = scalar_lea.sflag [#allocation7], %s620
        %s622 = sand.u32 %s166, 1
        %s623 = smul.addr %s622, 8
        %s624 = scalar_lea.vmem [#allocation6], %s623
        // Predicated region
        $region113: #{tpu_custom_call.1} parent=39 // pred_check
          %p625 = pneg %p176
        $region114: #{tpu_custom_call.1} parent=39 // pred_check_branch
          %627 = sbr.rel (%p625) target = $region116
        $region115: #{tpu_custom_call.1} parent=39 // pred_region
          %s629 = ssub.s32 128, 128
          %630 = vsyncadd %s621, %s629
          %s631 = sadd.s32 %s31, %s32
          %s632 = smul.addr %s631, 128
          %s633 = scalar_lea.hbm %s7, %s632
          %s635 = sshll.u32 %s624, 4
          %s636 = int_to_ptr.vmem [resolvable:$true] %s635
          %638 = dma.vmem_to_hbm [thread:$0]  %s636, 128, %s633, %s621
        $region116: #{tpu_custom_call.1} parent=39 // pred_fallthru
          _
      $region40: #{tpu_custom_call.1} parent=5 // pred_fallthru
        _
      %p639 = scmp.le.s32.totalorder 2, %s22
      // Predicated region
      $region117: #{tpu_custom_call.1} parent=5 // pred_check
        %p640 = pneg %p639
      $region118: #{tpu_custom_call.1} parent=5 // pred_check_branch
        %642 = sbr.rel (%p640) target = $region120
      $region119: #{tpu_custom_call.1} parent=5 // pred_region
        %s643 = ssub.s32 %s22, 2
        // Predicated region
        $region121: #{tpu_custom_call.1} parent=119 // pred_check
          %p644 = pneg %p182
        $region122: #{tpu_custom_call.1} parent=119 // pred_check_branch
          %646 = sbr.rel (%p644) target = $region124
        $region123: #{tpu_custom_call.1} parent=119 // pred_region
          %s647 = sand.u32 %s167, 1
          %s648 = scalar_lea.sflag [#allocation7], %s647
          %s649 = sand.u32 %s167, 1
          %s650 = smul.addr %s649, 8
          %s651 = scalar_lea.vmem [#allocation6], %s650
          %652 = dma.done %s648, 128
        $region124: #{tpu_custom_call.1} parent=119 // pred_fallthru
          _
      $region120: #{tpu_custom_call.1} parent=5 // pred_fallthru
        _
    $region6: #{tpu_custom_call.1} parent=1 // loop_footer
      %s26 = sadd.s32 1, %s22
    $region7: #{tpu_custom_call.1} parent=1 // loop_footer_branch
      %21 = sbr.rel target = $region3
    $region8: #{tpu_custom_call.1} parent=1 // loop_exit
      _
    %653 = vsyncpa [#allocation7], 1
    %s654 = scalar_lea.sflag [#allocation7], 1
    %655 = vsyncpa %s654, 1
  %656 = vsyncmov [#allocation3]
  %s657 = vpop.sfrf %656
  %p658 = scmp.eq.s32.totalorder %s657, 0
  %p659 = pneg %p658
  %661 = shalt.err (%p659)
  %s662 = scalar_lea.sflag [#allocation3], 1
  %663 = vsyncmov %s662
  %s664 = vpop.sfrf %663
  %p665 = scmp.eq.s32.totalorder %s664, 0
  %p666 = pneg %p665
  %668 = shalt.err (%p666)

</llo_original>
